<compile_context>
chip_gen: v7x
topology: tpu7x:2x2x1
jax: 0.10.0
libtpu: 0.0.40
codegen_flags: <defaults>
</compile_context>

<pallas_src>
import functools

import jax
import jax.numpy as jnp
from jax import lax
from jax.experimental import pallas as pl
from jax.experimental.pallas import tpu as pltpu


# ----------------------------- Pallas kernel --------------------------------
def _conv_bn_relu_kernel(x_ref, w_ref, shift_ref, o_ref, *, offsets, l_out):
    # x_ref:     (1, Cin, L_in)     padded, flattened image (compute dtype)
    # w_ref:     (KH*KW, Cout, Cin) conv taps with BN scale pre-folded
    # shift_ref: (Cout, 1)          beta - mean * scale   (f32)
    # o_ref:     (1, Cout, L_out)
    x = x_ref[0]                                   # (Cin, L_in)
    l_in = x.shape[-1]
    cout = w_ref.shape[1]
    acc = jnp.zeros((cout, l_out), jnp.float32)
    for t, off in enumerate(offsets):              # static unroll over KH*KW taps
        win = x if off == 0 else pltpu.roll(x, l_in - off, axis=1)
        acc = acc + jnp.dot(w_ref[t], win[:, :l_out],
                            preferred_element_type=jnp.float32)
    y = acc + shift_ref[...]
    o_ref[0] = jnp.maximum(y, 0.0).astype(o_ref.dtype)


# ------------------------------ helpers --------------------------------------
def _round_up(x, m):
    return (x + m - 1) // m * m


def _maybe_vmem_limit(needed_bytes):
    """Raise the scoped-VMEM limit only when needed; v5e default is only 16 MiB."""
    if needed_bytes <= (12 << 20):      # comfortably under the smallest default
        return None
    try:
        cap = pltpu.get_tpu_info().vmem_capacity_bytes
    except Exception:
        cap = 64 << 20                  # conservative (v7x per-core VMEM)
    return int(min(needed_bytes, 0.75 * cap))


# ------------------------------- forward --------------------------------------
def basic_conv2d(x_nchw, weight, gamma, beta, running_mean, running_var,
                 *, padding=1, eps=1e-3, compute_dtype=jnp.bfloat16,
                 out_dtype=None):
    """Forward of BasicConv2d. x: (N, Cin, H, W), weight: (Cout, Cin, KH, KW)."""
    cout, cin, kh, kw = weight.shape
    n, c, h, w = x_nchw.shape
    assert c == cin, (c, cin)
    out_dtype = x_nchw.dtype if out_dtype is None else out_dtype

    hp, wp = h + 2 * padding, w + 2 * padding
    ho, wo = hp - kh + 1, wp - kw + 1
    l_out = _round_up(ho * wp, 128)                       # lane-dense output width
    max_off = (kh - 1) * wp + (kw - 1)
    l_in = _round_up(l_out + max_off, 128)                # tap-window slack

    # Pad spatially, flatten (contiguous reshape), pad flat tail — ~1x traffic.
    xp = jnp.pad(x_nchw, ((0, 0), (0, 0), (padding, padding), (padding, padding)))
    xf = xp.reshape(n, cin, hp * wp)
    xf = jnp.pad(xf, ((0, 0), (0, 0), (0, l_in - hp * wp))).astype(compute_dtype)

    # Fold eval-mode BatchNorm: scale into the taps, shift stays f32.
    scale = gamma / jnp.sqrt(running_var + eps)                           # (Cout,)
    shift = (beta - running_mean * scale).astype(jnp.float32).reshape(cout, 1)
    w_taps = (jnp.transpose(weight, (2, 3, 0, 1)).reshape(kh * kw, cout, cin)
              * scale[None, :, None]).astype(compute_dtype)

    offsets = tuple(i * wp + j for i in range(kh) for j in range(kw))
    kernel = functools.partial(_conv_bn_relu_kernel, offsets=offsets, l_out=l_out)

    cbytes = jnp.dtype(compute_dtype).itemsize
    obytes = jnp.dtype(out_dtype).itemsize
    stream_bytes = cin * l_in * cbytes + cout * l_out * obytes      # per-step blocks
    invariant_bytes = kh * kw * cout * cin * cbytes + cout * 4      # weight + shift
    cp_kwargs = dict(dimension_semantics=("parallel",))
    limit = _maybe_vmem_limit(2 * stream_bytes + invariant_bytes + (4 << 20))
    if limit is not None:
        cp_kwargs["vmem_limit_bytes"] = limit

    cost = pl.CostEstimate(
        flops=2 * n * cout * cin * kh * kw * ho * wo,
        transcendentals=0,
        bytes_accessed=(n * (cin * l_in * cbytes + cout * l_out * obytes)
                        + kh * kw * cout * cin * cbytes + cout * 4))

    out = pl.pallas_call(
        kernel,
        out_shape=jax.ShapeDtypeStruct((n, cout, l_out), out_dtype),
        grid_spec=pltpu.PrefetchScalarGridSpec(
            num_scalar_prefetch=0,
            grid=(n,),
            in_specs=[
                pl.BlockSpec((1, cin, l_in), lambda b: (b, 0, 0)),
                pl.BlockSpec((kh * kw, cout, cin), lambda b: (0, 0, 0)),
                pl.BlockSpec((cout, 1), lambda b: (0, 0)),
            ],
            out_specs=pl.BlockSpec((1, cout, l_out), lambda b: (b, 0, 0)),
        ),
        compiler_params=pltpu.CompilerParams(**cp_kwargs),
        cost_estimate=cost,
    )(xf, w_taps, shift)

    # Crop the width slack and reshape straight to NCHW (no transpose).
    out = out[:, :, :ho * wp].reshape(n, cout, ho, wp)[:, :, :, :wo]
    return out


# ------------------------------ reference --------------------------------------
def _reference(x, weight, gamma, beta, mean, var, *, padding=1, eps=1e-3):
    y = lax.conv_general_dilated(
        x, weight, window_strides=(1, 1),
        padding=((padding, padding), (padding, padding)),
        dimension_numbers=("NCHW", "OIHW", "NCHW"))
    scale = gamma / jnp.sqrt(var + eps)
    shift = beta - mean * scale
    y = y * scale[None, :, None, None] + shift[None, :, None, None]
    return jnp.maximum(y, 0.0)


# -------------------------------- main ------------------------------------------
if __name__ == "__main__":
    # BasicConv2d(in_channels=4, out_channels=8, kernel_size=3, padding=1)
    N, Cin, H, W = 2, 4, 16, 16
    Cout, KH, KW, PAD = 8, 3, 3, 1

    key = jax.random.PRNGKey(0)
    k0, k1, k2, k3, k4, k5 = jax.random.split(key, 6)

    x = jax.random.normal(k0, (N, Cin, H, W), dtype=jnp.float32)
    weight = 0.1 * jax.random.normal(k1, (Cout, Cin, KH, KW), dtype=jnp.float32)
    gamma = 1.0 + 0.1 * jax.random.normal(k2, (Cout,), dtype=jnp.float32)
    beta = 0.1 * jax.random.normal(k3, (Cout,), dtype=jnp.float32)
    running_mean = 0.1 * jax.random.normal(k4, (Cout,), dtype=jnp.float32)
    running_var = jnp.abs(jax.random.normal(k5, (Cout,), dtype=jnp.float32)) + 0.5

    ref = _reference(x, weight, gamma, beta, running_mean, running_var,
                     padding=PAD, eps=1e-3)

    # f32 compute path: tight tolerance against the XLA reference.
    fwd_f32 = jax.jit(functools.partial(basic_conv2d, padding=PAD, eps=1e-3,
                                        compute_dtype=jnp.float32))
    out_f32 = jax.block_until_ready(fwd_f32(x, weight, gamma, beta,
                                            running_mean, running_var))
    assert out_f32.shape == (N, Cout, H, W), out_f32.shape
    assert jnp.allclose(out_f32, ref, atol=1e-4, rtol=1e-4), \
        float(jnp.max(jnp.abs(out_f32 - ref)))

    # bf16 MXU path (default: halves the x HBM stream); f32 accumulation.
    fwd_bf16 = jax.jit(functools.partial(basic_conv2d, padding=PAD, eps=1e-3,
                                         compute_dtype=jnp.bfloat16))
    out_bf16 = jax.block_until_ready(fwd_bf16(x, weight, gamma, beta,
                                              running_mean, running_var))
    assert out_bf16.shape == (N, Cout, H, W), out_bf16.shape
    assert jnp.allclose(out_bf16, ref, atol=3e-2, rtol=3e-2), \
        float(jnp.max(jnp.abs(out_bf16 - ref)))

    print("KERNEL_OK")
</pallas_src>

<mosaic_0001>
module attributes {stable_mosaic.version = 11 : i64} {
  func.func @_conv_bn_relu_kernel(%arg0: i32, %arg1: memref<1x4x512xf32, #tpu.memory_space<vmem>>, %arg2: memref<9x8x4xf32, #tpu.memory_space<vmem>>, %arg3: memref<8x1xf32, #tpu.memory_space<vmem>>, %arg4: memref<1x8x384xf32, #tpu.memory_space<vmem>>) attributes {dimension_semantics = [#tpu.dimension_semantics<parallel>], iteration_bounds = array<i64: 2>, scalar_prefetch = 0 : i64, scratch_operands = 0 : i64, tpu.core_type = #tpu.core_type<tc>, window_params = [{transform_indices = @transform_0, window_bounds = array<i64: 1, 4, 512>}, {pipeline_mode = #tpu.pipeline_mode<synchronous>, transform_indices = @transform_1, window_bounds = array<i64: 9, 8, 4>}, {pipeline_mode = #tpu.pipeline_mode<synchronous>, transform_indices = @transform_2, window_bounds = array<i64: 8, 1>}, {transform_indices = @transform_3, window_bounds = array<i64: 1, 8, 384>}]} {
    %c0 = arith.constant 0 : index
    %c0_0 = arith.constant 0 : index
    %c0_1 = arith.constant 0 : index
    %0 = vector.load %arg1[%c0, %c0_0, %c0_1] : memref<1x4x512xf32, #tpu.memory_space<vmem>>, vector<1x4x512xf32>
    %1 = vector.shape_cast %0 : vector<1x4x512xf32> to vector<4x512xf32>
    %cst = arith.constant 0.000000e+00 : f32
    %2 = vector.broadcast %cst : f32 to vector<8x384xf32>
    %c0_2 = arith.constant 0 : index
    %c0_3 = arith.constant 0 : index
    %c0_4 = arith.constant 0 : index
    %3 = vector.load %arg2[%c0_2, %c0_3, %c0_4] : memref<9x8x4xf32, #tpu.memory_space<vmem>>, vector<1x8x4xf32>
    %4 = vector.shape_cast %3 : vector<1x8x4xf32> to vector<8x4xf32>
    %5 = vector.extract_strided_slice %1 {offsets = [0, 0], sizes = [4, 384], strides = [1, 1]} : vector<4x512xf32> to vector<4x384xf32>
    %cst_5 = arith.constant dense<0.000000e+00> : vector<8x384xf32>
    %6 = tpu.matmul %4, %5, %cst_5 {dimension_numbers = #tpu.dot_dimension_numbers<[1], [0], [0], [1], [0, 0, 1, 1], [], []>} : vector<8x4xf32>, vector<4x384xf32>, vector<8x384xf32> -> vector<8x384xf32>
    %7 = arith.addf %2, %6 : vector<8x384xf32>
    %c511_i32 = arith.constant 511 : i32
    %8 = tpu.dynamic_rotate %1 by %c511_i32 dim 1 : vector<4x512xf32>, i32 -> vector<4x512xf32>
    %c1 = arith.constant 1 : index
    %c0_6 = arith.constant 0 : index
    %c0_7 = arith.constant 0 : index
    %9 = vector.load %arg2[%c1, %c0_6, %c0_7] : memref<9x8x4xf32, #tpu.memory_space<vmem>>, vector<1x8x4xf32>
    %10 = vector.shape_cast %9 : vector<1x8x4xf32> to vector<8x4xf32>
    %11 = vector.extract_strided_slice %8 {offsets = [0, 0], sizes = [4, 384], strides = [1, 1]} : vector<4x512xf32> to vector<4x384xf32>
    %cst_8 = arith.constant dense<0.000000e+00> : vector<8x384xf32>
    %12 = tpu.matmul %10, %11, %cst_8 {dimension_numbers = #tpu.dot_dimension_numbers<[1], [0], [0], [1], [0, 0, 1, 1], [], []>} : vector<8x4xf32>, vector<4x384xf32>, vector<8x384xf32> -> vector<8x384xf32>
    %13 = arith.addf %7, %12 : vector<8x384xf32>
    %c510_i32 = arith.constant 510 : i32
    %14 = tpu.dynamic_rotate %1 by %c510_i32 dim 1 : vector<4x512xf32>, i32 -> vector<4x512xf32>
    %c2 = arith.constant 2 : index
    %c0_9 = arith.constant 0 : index
    %c0_10 = arith.constant 0 : index
    %15 = vector.load %arg2[%c2, %c0_9, %c0_10] : memref<9x8x4xf32, #tpu.memory_space<vmem>>, vector<1x8x4xf32>
    %16 = vector.shape_cast %15 : vector<1x8x4xf32> to vector<8x4xf32>
    %17 = vector.extract_strided_slice %14 {offsets = [0, 0], sizes = [4, 384], strides = [1, 1]} : vector<4x512xf32> to vector<4x384xf32>
    %cst_11 = arith.constant dense<0.000000e+00> : vector<8x384xf32>
    %18 = tpu.matmul %16, %17, %cst_11 {dimension_numbers = #tpu.dot_dimension_numbers<[1], [0], [0], [1], [0, 0, 1, 1], [], []>} : vector<8x4xf32>, vector<4x384xf32>, vector<8x384xf32> -> vector<8x384xf32>
    %19 = arith.addf %13, %18 : vector<8x384xf32>
    %c494_i32 = arith.constant 494 : i32
    %20 = tpu.dynamic_rotate %1 by %c494_i32 dim 1 : vector<4x512xf32>, i32 -> vector<4x512xf32>
    %c3 = arith.constant 3 : index
    %c0_12 = arith.constant 0 : index
    %c0_13 = arith.constant 0 : index
    %21 = vector.load %arg2[%c3, %c0_12, %c0_13] : memref<9x8x4xf32, #tpu.memory_space<vmem>>, vector<1x8x4xf32>
    %22 = vector.shape_cast %21 : vector<1x8x4xf32> to vector<8x4xf32>
    %23 = vector.extract_strided_slice %20 {offsets = [0, 0], sizes = [4, 384], strides = [1, 1]} : vector<4x512xf32> to vector<4x384xf32>
    %cst_14 = arith.constant dense<0.000000e+00> : vector<8x384xf32>
    %24 = tpu.matmul %22, %23, %cst_14 {dimension_numbers = #tpu.dot_dimension_numbers<[1], [0], [0], [1], [0, 0, 1, 1], [], []>} : vector<8x4xf32>, vector<4x384xf32>, vector<8x384xf32> -> vector<8x384xf32>
    %25 = arith.addf %19, %24 : vector<8x384xf32>
    %c493_i32 = arith.constant 493 : i32
    %26 = tpu.dynamic_rotate %1 by %c493_i32 dim 1 : vector<4x512xf32>, i32 -> vector<4x512xf32>
    %c4 = arith.constant 4 : index
    %c0_15 = arith.constant 0 : index
    %c0_16 = arith.constant 0 : index
    %27 = vector.load %arg2[%c4, %c0_15, %c0_16] : memref<9x8x4xf32, #tpu.memory_space<vmem>>, vector<1x8x4xf32>
    %28 = vector.shape_cast %27 : vector<1x8x4xf32> to vector<8x4xf32>
    %29 = vector.extract_strided_slice %26 {offsets = [0, 0], sizes = [4, 384], strides = [1, 1]} : vector<4x512xf32> to vector<4x384xf32>
    %cst_17 = arith.constant dense<0.000000e+00> : vector<8x384xf32>
    %30 = tpu.matmul %28, %29, %cst_17 {dimension_numbers = #tpu.dot_dimension_numbers<[1], [0], [0], [1], [0, 0, 1, 1], [], []>} : vector<8x4xf32>, vector<4x384xf32>, vector<8x384xf32> -> vector<8x384xf32>
    %31 = arith.addf %25, %30 : vector<8x384xf32>
    %c492_i32 = arith.constant 492 : i32
    %32 = tpu.dynamic_rotate %1 by %c492_i32 dim 1 : vector<4x512xf32>, i32 -> vector<4x512xf32>
    %c5 = arith.constant 5 : index
    %c0_18 = arith.constant 0 : index
    %c0_19 = arith.constant 0 : index
    %33 = vector.load %arg2[%c5, %c0_18, %c0_19] : memref<9x8x4xf32, #tpu.memory_space<vmem>>, vector<1x8x4xf32>
    %34 = vector.shape_cast %33 : vector<1x8x4xf32> to vector<8x4xf32>
    %35 = vector.extract_strided_slice %32 {offsets = [0, 0], sizes = [4, 384], strides = [1, 1]} : vector<4x512xf32> to vector<4x384xf32>
    %cst_20 = arith.constant dense<0.000000e+00> : vector<8x384xf32>
    %36 = tpu.matmul %34, %35, %cst_20 {dimension_numbers = #tpu.dot_dimension_numbers<[1], [0], [0], [1], [0, 0, 1, 1], [], []>} : vector<8x4xf32>, vector<4x384xf32>, vector<8x384xf32> -> vector<8x384xf32>
    %37 = arith.addf %31, %36 : vector<8x384xf32>
    %c476_i32 = arith.constant 476 : i32
    %38 = tpu.dynamic_rotate %1 by %c476_i32 dim 1 : vector<4x512xf32>, i32 -> vector<4x512xf32>
    %c6 = arith.constant 6 : index
    %c0_21 = arith.constant 0 : index
    %c0_22 = arith.constant 0 : index
    %39 = vector.load %arg2[%c6, %c0_21, %c0_22] : memref<9x8x4xf32, #tpu.memory_space<vmem>>, vector<1x8x4xf32>
    %40 = vector.shape_cast %39 : vector<1x8x4xf32> to vector<8x4xf32>
    %41 = vector.extract_strided_slice %38 {offsets = [0, 0], sizes = [4, 384], strides = [1, 1]} : vector<4x512xf32> to vector<4x384xf32>
    %cst_23 = arith.constant dense<0.000000e+00> : vector<8x384xf32>
    %42 = tpu.matmul %40, %41, %cst_23 {dimension_numbers = #tpu.dot_dimension_numbers<[1], [0], [0], [1], [0, 0, 1, 1], [], []>} : vector<8x4xf32>, vector<4x384xf32>, vector<8x384xf32> -> vector<8x384xf32>
    %43 = arith.addf %37, %42 : vector<8x384xf32>
    %c475_i32 = arith.constant 475 : i32
    %44 = tpu.dynamic_rotate %1 by %c475_i32 dim 1 : vector<4x512xf32>, i32 -> vector<4x512xf32>
    %c7 = arith.constant 7 : index
    %c0_24 = arith.constant 0 : index
    %c0_25 = arith.constant 0 : index
    %45 = vector.load %arg2[%c7, %c0_24, %c0_25] : memref<9x8x4xf32, #tpu.memory_space<vmem>>, vector<1x8x4xf32>
    %46 = vector.shape_cast %45 : vector<1x8x4xf32> to vector<8x4xf32>
    %47 = vector.extract_strided_slice %44 {offsets = [0, 0], sizes = [4, 384], strides = [1, 1]} : vector<4x512xf32> to vector<4x384xf32>
    %cst_26 = arith.constant dense<0.000000e+00> : vector<8x384xf32>
    %48 = tpu.matmul %46, %47, %cst_26 {dimension_numbers = #tpu.dot_dimension_numbers<[1], [0], [0], [1], [0, 0, 1, 1], [], []>} : vector<8x4xf32>, vector<4x384xf32>, vector<8x384xf32> -> vector<8x384xf32>
    %49 = arith.addf %43, %48 : vector<8x384xf32>
    %c474_i32 = arith.constant 474 : i32
    %50 = tpu.dynamic_rotate %1 by %c474_i32 dim 1 : vector<4x512xf32>, i32 -> vector<4x512xf32>
    %c8 = arith.constant 8 : index
    %c0_27 = arith.constant 0 : index
    %c0_28 = arith.constant 0 : index
    %51 = vector.load %arg2[%c8, %c0_27, %c0_28] : memref<9x8x4xf32, #tpu.memory_space<vmem>>, vector<1x8x4xf32>
    %52 = vector.shape_cast %51 : vector<1x8x4xf32> to vector<8x4xf32>
    %53 = vector.extract_strided_slice %50 {offsets = [0, 0], sizes = [4, 384], strides = [1, 1]} : vector<4x512xf32> to vector<4x384xf32>
    %cst_29 = arith.constant dense<0.000000e+00> : vector<8x384xf32>
    %54 = tpu.matmul %52, %53, %cst_29 {dimension_numbers = #tpu.dot_dimension_numbers<[1], [0], [0], [1], [0, 0, 1, 1], [], []>} : vector<8x4xf32>, vector<4x384xf32>, vector<8x384xf32> -> vector<8x384xf32>
    %55 = arith.addf %49, %54 : vector<8x384xf32>
    %c0_30 = arith.constant 0 : index
    %c0_31 = arith.constant 0 : index
    %56 = vector.load %arg3[%c0_30, %c0_31] : memref<8x1xf32, #tpu.memory_space<vmem>>, vector<8x1xf32>
    %57 = vector.broadcast %56 : vector<8x1xf32> to vector<8x384xf32>
    %58 = arith.addf %55, %57 : vector<8x384xf32>
    %cst_32 = arith.constant 0.000000e+00 : f32
    %59 = vector.broadcast %cst_32 : f32 to vector<8x384xf32>
    %60 = arith.maximumf %58, %59 : vector<8x384xf32>
    %c0_33 = arith.constant 0 : index
    %c0_34 = arith.constant 0 : index
    %c0_35 = arith.constant 0 : index
    %61 = vector.load %arg4[%c0_33, %c0_34, %c0_35] : memref<1x8x384xf32, #tpu.memory_space<vmem>>, vector<1x8x384xf32>
    %62 = vector.shape_cast %61 : vector<1x8x384xf32> to vector<8x384xf32>
    %63 = vector.shape_cast %60 : vector<8x384xf32> to vector<1x8x384xf32>
    tpu.vector_store %arg4[%c0_33, %c0_34, %c0_35], %63 {strides = array<i32>} : memref<1x8x384xf32, #tpu.memory_space<vmem>>, vector<1x8x384xf32>,
    return
  }
  func.func @transform_0(%arg0: i32) -> (i32, i32, i32) {
    %c0_i32 = arith.constant 0 : i32
    %c0_i32_0 = arith.constant 0 : i32
    %c0_i32_1 = arith.constant 0 : i32
    return %arg0, %c0_i32, %c0_i32_0 : i32, i32, i32
  }
  func.func @transform_1(%arg0: i32) -> (i32, i32, i32) {
    %c0_i32 = arith.constant 0 : i32
    %c0_i32_0 = arith.constant 0 : i32
    %c0_i32_1 = arith.constant 0 : i32
    %c0_i32_2 = arith.constant 0 : i32
    return %c0_i32, %c0_i32_0, %c0_i32_1 : i32, i32, i32
  }
  func.func @transform_2(%arg0: i32) -> (i32, i32) {
    %c0_i32 = arith.constant 0 : i32
    %c0_i32_0 = arith.constant 0 : i32
    %c0_i32_1 = arith.constant 0 : i32
    return %c0_i32, %c0_i32_0 : i32, i32
  }
  func.func @transform_3(%arg0: i32) -> (i32, i32, i32) {
    %c0_i32 = arith.constant 0 : i32
    %c0_i32_0 = arith.constant 0 : i32
    %c0_i32_1 = arith.constant 0 : i32
    return %arg0, %c0_i32, %c0_i32_0 : i32, i32, i32
  }
}

</mosaic_0001>

<llo_original>
// kernel: basic_conv2d.1
$region0: #{basic_conv2d.1}
  #allocation0 [shape = 'u32[]', space=smem, size = 0x4, offset = 0x4, fixed_abs, tag = 'smem constant byte address 0x4 - core index']
  #allocation1 [shape = 'u32[144,128]{1,0:T(1,128)}', space=vmem, size = 0x12000, scoped, tag = 'internal scratch']
  %s0 = inlined_call_operand.vmem [shape: f32[2,4,512], index: 0, kind: input, shape index: {}]
  %s1 = inlined_call_operand.vmem [shape: f32[9,8,4], index: 1, kind: input, shape index: {}]
  %s2 = inlined_call_operand.vmem [shape: f32[8,1], index: 2, kind: input, shape index: {}]
  %s3 = inlined_call_operand.vmem [shape: f32[2,8,384], index: 3, kind: output, shape index: {}]
  %s4 = sld [smem:[#allocation0]]
  $region45: #{basic_conv2d.1} parent=0
    _
  %s6 = ssub.s32 1, %s4
  %s7 = scalar_select 0, %s6, %s4
  loop: start=0, step=1, limit=4
  $region2: #{basic_conv2d.1} parent=0 // loop_pre_header
    _
  $region3: #{basic_conv2d.1} parent=0 // loop_header
    %s9 = sphi 0, %s13
    %p10 = scmp.ge.s32.totalorder %s9, 4
    %s19 = sphi 0, %s21
    %s22 = sphi 0, %s19
    %s23 = sphi 0, %s22
    %s39 = sphi 0, %s23
    %s43 = sphi 0, %s43
    %s45 = sphi 0, %s43
    %s46 = sphi 0, %s45
    %s60 = sphi 0, %s46
    %s64 = sphi 0, %s64
    %s66 = sphi 0, %s64
    %s67 = sphi 0, %s66
    %s81 = sphi 0, %s67
    %s87 = sphi 0, %s89
    %s90 = sphi 0, %s87
    %s91 = sphi 0, %s90
    %s107 = sphi 0, %s91
  $region4: #{basic_conv2d.1} parent=0 // loop_header_branch
    %12 = sbr.rel (%p10) target = $region8
  $region5: #{basic_conv2d.1} parent=0 // loop_body
    %s14 = ssub.s32 %s9, 1
    %s15 = ssub.s32 %s9, 2
    %s16 = sadd.s32 %s9, 1
    %s17 = ssub.s32 %s9, %s16
    %p18 = scmp.eq.s32.totalorder %s17, 0
    %s20 = sadd.s32 %s19, 1
    %s21 = scalar_select %p18, %s19, %s20
    %p24 = pneg %p18
    %p25 = scmp.eq.s32.totalorder %s9, 1
    %p26 = por %p24, %p25
    %p27 = scmp.ne.s32.totalorder %s19, %s22
    %p28 = scmp.eq.s32.totalorder %s9, 0
    %p29 = por %p27, %p28
    %p30 = scmp.ne.s32.totalorder %s19, %s22
    %p31 = scmp.eq.s32.totalorder %s14, 1
    %p32 = por %p30, %p31
    %p33 = scmp.ne.s32.totalorder %s22, %s23
    %p34 = scmp.eq.s32.totalorder %s14, 0
    %p35 = por %p33, %p34
    %p36 = scmp.ne.s32.totalorder %s22, %s23
    %p37 = scmp.eq.s32.totalorder %s15, 1
    %p38 = por %p36, %p37
    %p40 = scmp.ne.s32.totalorder %s23, %s39
    %p41 = scmp.eq.s32.totalorder %s15, 0
    %p42 = por %p40, %p41
    %s44 = sadd.s32 %s43, 1
    %p47 = scmp.eq.s32.totalorder %s9, 1
    %p48 = scmp.ne.s32.totalorder %s43, %s45
    %p49 = scmp.eq.s32.totalorder %s9, 0
    %p50 = por %p48, %p49
    %p51 = scmp.ne.s32.totalorder %s43, %s45
    %p52 = scmp.eq.s32.totalorder %s14, 1
    %p53 = por %p51, %p52
    %p54 = scmp.ne.s32.totalorder %s45, %s46
    %p55 = scmp.eq.s32.totalorder %s14, 0
    %p56 = por %p54, %p55
    %p57 = scmp.ne.s32.totalorder %s45, %s46
    %p58 = scmp.eq.s32.totalorder %s15, 1
    %p59 = por %p57, %p58
    %p61 = scmp.ne.s32.totalorder %s46, %s60
    %p62 = scmp.eq.s32.totalorder %s15, 0
    %p63 = por %p61, %p62
    %s65 = sadd.s32 %s64, 1
    %p68 = scmp.eq.s32.totalorder %s9, 1
    %p69 = scmp.ne.s32.totalorder %s64, %s66
    %p70 = scmp.eq.s32.totalorder %s9, 0
    %p71 = por %p69, %p70
    %p72 = scmp.ne.s32.totalorder %s64, %s66
    %p73 = scmp.eq.s32.totalorder %s14, 1
    %p74 = por %p72, %p73
    %p75 = scmp.ne.s32.totalorder %s66, %s67
    %p76 = scmp.eq.s32.totalorder %s14, 0
    %p77 = por %p75, %p76
    %p78 = scmp.ne.s32.totalorder %s66, %s67
    %p79 = scmp.eq.s32.totalorder %s15, 1
    %p80 = por %p78, %p79
    %p82 = scmp.ne.s32.totalorder %s67, %s81
    %p83 = scmp.eq.s32.totalorder %s15, 0
    %p84 = por %p82, %p83
    %s85 = ssub.s32 %s9, %s16
    %p86 = scmp.eq.s32.totalorder %s85, 0
    %s88 = sadd.s32 %s87, 1
    %s89 = scalar_select %p86, %s87, %s88
    %p92 = pneg %p86
    %p93 = scmp.eq.s32.totalorder %s9, 1
    %p94 = por %p92, %p93
    %p95 = scmp.ne.s32.totalorder %s87, %s90
    %p96 = scmp.eq.s32.totalorder %s9, 0
    %p97 = por %p95, %p96
    %p98 = scmp.ne.s32.totalorder %s87, %s90
    %p99 = scmp.eq.s32.totalorder %s14, 1
    %p100 = por %p98, %p99
    %p101 = scmp.ne.s32.totalorder %s90, %s91
    %p102 = scmp.eq.s32.totalorder %s14, 0
    %p103 = por %p101, %p102
    %p104 = scmp.ne.s32.totalorder %s90, %s91
    %p105 = scmp.eq.s32.totalorder %s15, 1
    %p106 = por %p104, %p105
    %p108 = scmp.ne.s32.totalorder %s91, %s107
    %p109 = scmp.eq.s32.totalorder %s15, 0
    %p110 = por %p108, %p109
    %p111 = scmp.le.s32.totalorder 1, %s9
    %p112 = scmp.lt.s32.totalorder %s9, 3
    %p113 = pnand %p111, %p112
    %p114 = pneg %p113
    // Predicated region
    $region9: #{basic_conv2d.1} parent=5 // pred_check
      _
    $region10: #{basic_conv2d.1} parent=5 // pred_check_branch
      %116 = sbr.rel (%p113) target = $region12
    $region11: #{basic_conv2d.1} parent=5 // pred_region
      %s117 = ssub.s32 %s9, 1
      // Predicated region
      $region13: #{basic_conv2d.1} parent=11 // pred_check
        %p118 = pneg %p56
      $region14: #{basic_conv2d.1} parent=11 // pred_check_branch
        %120 = sbr.rel (%p118) target = $region16
      $region15: #{basic_conv2d.1} parent=11 // pred_region
        _
      $region16: #{basic_conv2d.1} parent=11 // pred_fallthru
        _
      // Predicated region
      $region17: #{basic_conv2d.1} parent=11 // pred_check
        %p121 = pneg %p77
      $region18: #{basic_conv2d.1} parent=11 // pred_check_branch
        %123 = sbr.rel (%p121) target = $region20
      $region19: #{basic_conv2d.1} parent=11 // pred_region
        _
      $region20: #{basic_conv2d.1} parent=11 // pred_fallthru
        _
    $region12: #{basic_conv2d.1} parent=5 // pred_fallthru
      _
    %p124 = scmp.lt.s32.totalorder %s9, 2
    // Predicated region
    $region21: #{basic_conv2d.1} parent=5 // pred_check
      %p125 = pneg %p124
    $region22: #{basic_conv2d.1} parent=5 // pred_check_branch
      %127 = sbr.rel (%p125) target = $region24
    $region23: #{basic_conv2d.1} parent=5 // pred_region
      // Predicated region
      $region25: #{basic_conv2d.1} parent=23 // pred_check
        %p128 = pneg %p29
      $region26: #{basic_conv2d.1} parent=23 // pred_check_branch
        %130 = sbr.rel (%p128) target = $region28
      $region27: #{basic_conv2d.1} parent=23 // pred_region
        %p131 = scmp.lt.s32.totalorder %s9, 1
        %s132 = scalar_select %p131, %s9, 1
        %s133 = smul.addr %s132, 4
        %s134 = smul.addr %s133, 4
        %s135 = scalar_lea.vmem %s0, %s134
      $region28: #{basic_conv2d.1} parent=23 // pred_fallthru
        _
    $region24: #{basic_conv2d.1} parent=5 // pred_fallthru
      _
    %p136 = scmp.le.s32.totalorder 1, %s9
    %p137 = scmp.lt.s32.totalorder %s9, 3
    %p138 = pnand %p136, %p137
    %p139 = pneg %p138
    // Predicated region
    $region29: #{basic_conv2d.1} parent=5 // pred_check
      _
    $region30: #{basic_conv2d.1} parent=5 // pred_check_branch
      %141 = sbr.rel (%p138) target = $region32
    $region31: #{basic_conv2d.1} parent=5 // pred_region
      %s142 = ssub.s32 %s9, 1
      %p143 = scmp.lt.s32.totalorder %s14, 1
      %s144 = scalar_select %p143, %s14, 1
      %s145 = smul.addr %s144, 4
      %s146 = smul.addr %s145, 4
      %s147 = scalar_lea.vmem %s0, %s146
      %p148 = pneg %p35
      %p149 = pneg %p32
      %p150 = pneg %p56
      %p151 = pneg %p53
      %p152 = pneg %p77
      %p153 = pneg %p74
      %p154 = pneg %p103
      %p155 = pneg %p100
      %p156 = scmp.lt.s32.totalorder %s14, 1
      %s157 = scalar_select %p156, %s14, 1
      %s158 = smul.addr %s157, 3
      %s159 = smul.addr %s158, 8
      %s160 = scalar_lea.vmem %s3, %s159
      %p161 = scmp.lt.s32.totalorder %s14, 1
      %s162 = scalar_select %p161, %s14, 1
      %s163 = smul.addr %s162, 4
      %s164 = smul.addr %s163, 4
      %s165 = scalar_lea.vmem %s0, %s164
      %p166 = scmp.lt.s32.totalorder %s14, 1
      %s167 = scalar_select %p166, %s14, 1
      %s168 = smul.addr %s167, 3
      %s169 = smul.addr %s168, 8
      %s170 = scalar_lea.vmem %s3, %s169
      %v171 = vld [vmem:[%s165] sm:$0xff]
      %v172 = vld [vmem:[%s165 + $0x8] sm:$0xff]
      %v173 = vld [vmem:[%s1] sm:$0xff]
      %v176 = vcombine.high %v171, %v171
      %v177 = vcombine.high %v172, %v172
      %180 = vrot.lane.b32.xlu0 %v171, 127
      %v181 = vpop.permute.xlu0 %180
      %182 = vrot.lane.b32.xlu0 %v176, 127
      %v183 = vpop.permute.xlu0 %182
      %184 = vrot.lane.b32.xlu0 %v172, 127
      %v185 = vpop.permute.xlu0 %184
      %186 = vrot.lane.b32.xlu0 %v177, 127
      %v187 = vpop.permute.xlu0 %186
      %v188 = vlaneseq
      %v189 = vand.u32 %v188, 127
      %vm190 = vcmp.lt.s32.totalorder %v189, 127
      %v191 = vsel %vm190, %v185, %v187
      %v192 = vsel %vm190, %v183, %v185
      %v193 = vsel %vm190, %v181, %v183
      %s194 = scalar_lea.vmem %s1, 8
      %v195 = vld [vmem:[%s194] sm:$0xff]
      %vm196 = vcmask 31744
      %v198 = vsel %vm196, %v195, 0
      %vm200 = vcmask 1043456
      %v202 = vsel %vm200, %v193, 0
      %v205 = vsel %vm200, %v192, 0
      %v208 = vsel %vm200, %v191, 0
      %210 = vmatprep.subr.mxu0 %v205
      %211 = vmatpush1.msra.mxu0 %v202
      %212 = vmatprep.subr.mxu0 0.0
      %213 = vmatpush1.msra.mxu0 0.0
      %214 = vmatprep.subr.mxu0 0.0
      %215 = vmatpush1.msra.mxu0 0.0
      %216 = vmatprep.subr.mxu0 0.0
      %217 = vmatpush1.msra.mxu0 0.0
      %218 = vmatprep.subr.mxu0 0.0
      %219 = vmatpush1.msra.mxu0 0.0
      %220 = vmatprep.subr.mxu0 0.0
      %221 = vmatpush1.msra.mxu0 0.0
      %222 = vmatprep.subr.mxu0 0.0
      %223 = vmatpush1.msra.mxu0 0.0
      %224 = vmatprep.subr.mxu0 0.0
      %225 = vmatpush1.msra.mxu0 0.0
      %226 = vmatprep.subr.mxu0 0.0
      %227 = vmatpush1.msra.mxu0 0.0
      %228 = vmatprep.subr.mxu0 0.0
      %229 = vmatpush1.msra.mxu0 0.0
      %230 = vmatprep.subr.mxu0 0.0
      %231 = vmatpush1.msra.mxu0 0.0
      %232 = vmatprep.subr.mxu0 0.0
      %233 = vmatpush1.msra.mxu0 0.0
      %234 = vmatprep.subr.mxu0 0.0
      %235 = vmatpush1.msra.mxu0 0.0
      %236 = vmatprep.subr.mxu0 0.0
      %237 = vmatpush1.msra.mxu0 0.0
      %238 = vmatprep.subr.mxu0 0.0
      %239 = vmatpush1.msra.mxu0 0.0
      %240 = vmatprep.subr.mxu0 0.0
      %241 = vmatpush1.msra.mxu0 0.0
      %242 = vmatprep.subr.mxu0 0.0
      %243 = vmatpush1.msra.mxu0 0.0
      %244 = vmatprep.subr.mxu0 0.0
      %245 = vmatpush1.msra.mxu0 0.0
      %246 = vmatprep.subr.mxu0 0.0
      %247 = vmatpush1.msra.mxu0 0.0
      %248 = vmatprep.subr.mxu0 0.0
      %249 = vmatpush1.msra.mxu0 0.0
      %250 = vmatprep.subr.mxu0 0.0
      %251 = vmatpush1.msra.mxu0 0.0
      %252 = vmatprep.subr.mxu0 0.0
      %253 = vmatpush1.msra.mxu0 0.0
      %254 = vmatprep.subr.mxu0 0.0
      %255 = vmatpush1.msra.mxu0 0.0
      %256 = vmatprep.subr.mxu0 0.0
      %257 = vmatpush1.msra.mxu0 0.0
      %258 = vmatprep.subr.mxu0 0.0
      %259 = vmatpush1.msra.mxu0 0.0
      %260 = vmatprep.subr.mxu0 0.0
      %261 = vmatpush1.msra.mxu0 0.0
      %262 = vmatprep.subr.mxu0 0.0
      %263 = vmatpush1.msra.mxu0 0.0
      %264 = vmatprep.subr.mxu0 0.0
      %265 = vmatpush1.msra.mxu0 0.0
      %266 = vmatprep.subr.mxu0 0.0
      %267 = vmatpush1.msra.mxu0 0.0
      %268 = vmatprep.subr.mxu0 0.0
      %269 = vmatpush1.msra.mxu0 0.0
      %270 = vmatprep.subr.mxu0 0.0
      %271 = vmatpush1.msra.mxu0 0.0
      %272 = vmatprep.subr.mxu0 0.0
      %273 = vmatpush1.msra.mxu0 0.0
      %274 = vmatprep.mubr.f32.mxu0 0.0
      %275 = vmatmul.mubr.f32.gmra.mrb[0].mxu0 %v198
      %v276 = vpop.f32.mrb[0].mxu0
      %v277 = vadd.f32 0.0, %v276
      %v278 = vpop.f32.mrb[0].mxu0
      %v279 = vadd.f32 0.0, %v278
      %280 = vdwg.mxu0
      %281 = vmatprep.subr.mxu0 0.0
      %282 = vmatpush1.msra.mxu0 %v208
      %283 = vmatprep.subr.mxu0 0.0
      %284 = vmatpush1.msra.mxu0 0.0
      %285 = vmatprep.subr.mxu0 0.0
      %286 = vmatpush1.msra.mxu0 0.0
      %287 = vmatprep.subr.mxu0 0.0
      %288 = vmatpush1.msra.mxu0 0.0
      %289 = vmatprep.subr.mxu0 0.0
      %290 = vmatpush1.msra.mxu0 0.0
      %291 = vmatprep.subr.mxu0 0.0
      %292 = vmatpush1.msra.mxu0 0.0
      %293 = vmatprep.subr.mxu0 0.0
      %294 = vmatpush1.msra.mxu0 0.0
      %295 = vmatprep.subr.mxu0 0.0
      %296 = vmatpush1.msra.mxu0 0.0
      %297 = vmatprep.subr.mxu0 0.0
      %298 = vmatpush1.msra.mxu0 0.0
      %299 = vmatprep.subr.mxu0 0.0
      %300 = vmatpush1.msra.mxu0 0.0
      %301 = vmatprep.subr.mxu0 0.0
      %302 = vmatpush1.msra.mxu0 0.0
      %303 = vmatprep.subr.mxu0 0.0
      %304 = vmatpush1.msra.mxu0 0.0
      %305 = vmatprep.subr.mxu0 0.0
      %306 = vmatpush1.msra.mxu0 0.0
      %307 = vmatprep.subr.mxu0 0.0
      %308 = vmatpush1.msra.mxu0 0.0
      %309 = vmatprep.subr.mxu0 0.0
      %310 = vmatpush1.msra.mxu0 0.0
      %311 = vmatprep.subr.mxu0 0.0
      %312 = vmatpush1.msra.mxu0 0.0
      %313 = vmatprep.subr.mxu0 0.0
      %314 = vmatpush1.msra.mxu0 0.0
      %315 = vmatprep.subr.mxu0 0.0
      %316 = vmatpush1.msra.mxu0 0.0
      %317 = vmatprep.subr.mxu0 0.0
      %318 = vmatpush1.msra.mxu0 0.0
      %319 = vmatprep.subr.mxu0 0.0
      %320 = vmatpush1.msra.mxu0 0.0
      %321 = vmatprep.subr.mxu0 0.0
      %322 = vmatpush1.msra.mxu0 0.0
      %323 = vmatprep.subr.mxu0 0.0
      %324 = vmatpush1.msra.mxu0 0.0
      %325 = vmatprep.subr.mxu0 0.0
      %326 = vmatpush1.msra.mxu0 0.0
      %327 = vmatprep.subr.mxu0 0.0
      %328 = vmatpush1.msra.mxu0 0.0
      %329 = vmatprep.subr.mxu0 0.0
      %330 = vmatpush1.msra.mxu0 0.0
      %331 = vmatprep.subr.mxu0 0.0
      %332 = vmatpush1.msra.mxu0 0.0
      %333 = vmatprep.subr.mxu0 0.0
      %334 = vmatpush1.msra.mxu0 0.0
      %335 = vmatprep.subr.mxu0 0.0
      %336 = vmatpush1.msra.mxu0 0.0
      %337 = vmatprep.subr.mxu0 0.0
      %338 = vmatpush1.msra.mxu0 0.0
      %339 = vmatprep.subr.mxu0 0.0
      %340 = vmatpush1.msra.mxu0 0.0
      %341 = vmatprep.subr.mxu0 0.0
      %342 = vmatpush1.msra.mxu0 0.0
      %343 = vmatprep.subr.mxu0 0.0
      %344 = vmatpush1.msra.mxu0 0.0
      %345 = vmatprep.mubr.f32.mxu0 0.0
      %346 = vmatmul.mubr.f32.gmra.mrb[0].mxu0 %v198
      %v347 = vpop.f32.mrb[0].mxu0
      %v348 = vadd.f32 0.0, %v347
      %v349 = vpop.f32.mrb[0].mxu0
      %350 = vdwg.mxu0
      %v352 = vsel %vm196, %v173, 0
      %v354 = vsel %vm200, %v171, 0
      %v356 = vsel %vm200, %v176, 0
      %v358 = vsel %vm200, %v172, 0
      %360 = vmatprep.subr.mxu0 %v356
      %361 = vmatpush1.msra.mxu0 %v354
      %362 = vmatprep.subr.mxu0 0.0
      %363 = vmatpush1.msra.mxu0 0.0
      %364 = vmatprep.subr.mxu0 0.0
      %365 = vmatpush1.msra.mxu0 0.0
      %366 = vmatprep.subr.mxu0 0.0
      %367 = vmatpush1.msra.mxu0 0.0
      %368 = vmatprep.subr.mxu0 0.0
      %369 = vmatpush1.msra.mxu0 0.0
      %370 = vmatprep.subr.mxu0 0.0
      %371 = vmatpush1.msra.mxu0 0.0
      %372 = vmatprep.subr.mxu0 0.0
      %373 = vmatpush1.msra.mxu0 0.0
      %374 = vmatprep.subr.mxu0 0.0
      %375 = vmatpush1.msra.mxu0 0.0
      %376 = vmatprep.subr.mxu0 0.0
      %377 = vmatpush1.msra.mxu0 0.0
      %378 = vmatprep.subr.mxu0 0.0
      %379 = vmatpush1.msra.mxu0 0.0
      %380 = vmatprep.subr.mxu0 0.0
      %381 = vmatpush1.msra.mxu0 0.0
      %382 = vmatprep.subr.mxu0 0.0
      %383 = vmatpush1.msra.mxu0 0.0
      %384 = vmatprep.subr.mxu0 0.0
      %385 = vmatpush1.msra.mxu0 0.0
      %386 = vmatprep.subr.mxu0 0.0
      %387 = vmatpush1.msra.mxu0 0.0
      %388 = vmatprep.subr.mxu0 0.0
      %389 = vmatpush1.msra.mxu0 0.0
      %390 = vmatprep.subr.mxu0 0.0
      %391 = vmatpush1.msra.mxu0 0.0
      %392 = vmatprep.subr.mxu0 0.0
      %393 = vmatpush1.msra.mxu0 0.0
      %394 = vmatprep.subr.mxu0 0.0
      %395 = vmatpush1.msra.mxu0 0.0
      %396 = vmatprep.subr.mxu0 0.0
      %397 = vmatpush1.msra.mxu0 0.0
      %398 = vmatprep.subr.mxu0 0.0
      %399 = vmatpush1.msra.mxu0 0.0
      %400 = vmatprep.subr.mxu0 0.0
      %401 = vmatpush1.msra.mxu0 0.0
      %402 = vmatprep.subr.mxu0 0.0
      %403 = vmatpush1.msra.mxu0 0.0
      %404 = vmatprep.subr.mxu0 0.0
      %405 = vmatpush1.msra.mxu0 0.0
      %406 = vmatprep.subr.mxu0 0.0
      %407 = vmatpush1.msra.mxu0 0.0
      %408 = vmatprep.subr.mxu0 0.0
      %409 = vmatpush1.msra.mxu0 0.0
      %410 = vmatprep.subr.mxu0 0.0
      %411 = vmatpush1.msra.mxu0 0.0
      %412 = vmatprep.subr.mxu0 0.0
      %413 = vmatpush1.msra.mxu0 0.0
      %414 = vmatprep.subr.mxu0 0.0
      %415 = vmatpush1.msra.mxu0 0.0
      %416 = vmatprep.subr.mxu0 0.0
      %417 = vmatpush1.msra.mxu0 0.0
      %418 = vmatprep.subr.mxu0 0.0
      %419 = vmatpush1.msra.mxu0 0.0
      %420 = vmatprep.subr.mxu0 0.0
      %421 = vmatpush1.msra.mxu0 0.0
      %422 = vmatprep.subr.mxu0 0.0
      %423 = vmatpush1.msra.mxu0 0.0
      %424 = vmatprep.mubr.f32.mxu0 0.0
      %425 = vmatmul.mubr.f32.gmra.mrb[0].mxu0 %v352
      %v426 = vpop.f32.mrb[0].mxu0
      %v427 = vadd.f32 %v277, %v426
      %v428 = vpop.f32.mrb[0].mxu0
      %v429 = vadd.f32 %v279, %v428
      %430 = vdwg.mxu0
      %431 = vmatprep.subr.mxu0 0.0
      %432 = vmatpush1.msra.mxu0 %v358
      %433 = vmatprep.subr.mxu0 0.0
      %434 = vmatpush1.msra.mxu0 0.0
      %435 = vmatprep.subr.mxu0 0.0
      %436 = vmatpush1.msra.mxu0 0.0
      %437 = vmatprep.subr.mxu0 0.0
      %438 = vmatpush1.msra.mxu0 0.0
      %439 = vmatprep.subr.mxu0 0.0
      %440 = vmatpush1.msra.mxu0 0.0
      %441 = vmatprep.subr.mxu0 0.0
      %442 = vmatpush1.msra.mxu0 0.0
      %443 = vmatprep.subr.mxu0 0.0
      %444 = vmatpush1.msra.mxu0 0.0
      %445 = vmatprep.subr.mxu0 0.0
      %446 = vmatpush1.msra.mxu0 0.0
      %447 = vmatprep.subr.mxu0 0.0
      %448 = vmatpush1.msra.mxu0 0.0
      %449 = vmatprep.subr.mxu0 0.0
      %450 = vmatpush1.msra.mxu0 0.0
      %451 = vmatprep.subr.mxu0 0.0
      %452 = vmatpush1.msra.mxu0 0.0
      %453 = vmatprep.subr.mxu0 0.0
      %454 = vmatpush1.msra.mxu0 0.0
      %455 = vmatprep.subr.mxu0 0.0
      %456 = vmatpush1.msra.mxu0 0.0
      %457 = vmatprep.subr.mxu0 0.0
      %458 = vmatpush1.msra.mxu0 0.0
      %459 = vmatprep.subr.mxu0 0.0
      %460 = vmatpush1.msra.mxu0 0.0
      %461 = vmatprep.subr.mxu0 0.0
      %462 = vmatpush1.msra.mxu0 0.0
      %463 = vmatprep.subr.mxu0 0.0
      %464 = vmatpush1.msra.mxu0 0.0
      %465 = vmatprep.subr.mxu0 0.0
      %466 = vmatpush1.msra.mxu0 0.0
      %467 = vmatprep.subr.mxu0 0.0
      %468 = vmatpush1.msra.mxu0 0.0
      %469 = vmatprep.subr.mxu0 0.0
      %470 = vmatpush1.msra.mxu0 0.0
      %471 = vmatprep.subr.mxu0 0.0
      %472 = vmatpush1.msra.mxu0 0.0
      %473 = vmatprep.subr.mxu0 0.0
      %474 = vmatpush1.msra.mxu0 0.0
      %475 = vmatprep.subr.mxu0 0.0
      %476 = vmatpush1.msra.mxu0 0.0
      %477 = vmatprep.subr.mxu0 0.0
      %478 = vmatpush1.msra.mxu0 0.0
      %479 = vmatprep.subr.mxu0 0.0
      %480 = vmatpush1.msra.mxu0 0.0
      %481 = vmatprep.subr.mxu0 0.0
      %482 = vmatpush1.msra.mxu0 0.0
      %483 = vmatprep.subr.mxu0 0.0
      %484 = vmatpush1.msra.mxu0 0.0
      %485 = vmatprep.subr.mxu0 0.0
      %486 = vmatpush1.msra.mxu0 0.0
      %487 = vmatprep.subr.mxu0 0.0
      %488 = vmatpush1.msra.mxu0 0.0
      %489 = vmatprep.subr.mxu0 0.0
      %490 = vmatpush1.msra.mxu0 0.0
      %491 = vmatprep.subr.mxu0 0.0
      %492 = vmatpush1.msra.mxu0 0.0
      %493 = vmatprep.subr.mxu0 0.0
      %494 = vmatpush1.msra.mxu0 0.0
      %495 = vmatprep.mubr.f32.mxu0 0.0
      %496 = vmatmul.mubr.f32.gmra.mrb[0].mxu0 %v352
      %v497 = vpop.f32.mrb[0].mxu0
      %v498 = vadd.f32 %v348, %v497
      %v499 = vpop.f32.mrb[0].mxu0
      %500 = vdwg.mxu0
      %501 = vrot.lane.b32.xlu0 %v171, 126
      %v502 = vpop.permute.xlu0 %501
      %503 = vrot.lane.b32.xlu0 %v176, 126
      %v504 = vpop.permute.xlu0 %503
      %505 = vrot.lane.b32.xlu0 %v172, 126
      %v506 = vpop.permute.xlu0 %505
      %507 = vrot.lane.b32.xlu0 %v177, 126
      %v508 = vpop.permute.xlu0 %507
      %vm509 = vcmp.lt.s32.totalorder %v189, 126
      %v510 = vsel %vm509, %v506, %v508
      %v511 = vsel %vm509, %v504, %v506
      %v512 = vsel %vm509, %v502, %v504
      %s513 = scalar_lea.vmem %s1, 16
      %v514 = vld [vmem:[%s513] sm:$0xff]
      %v516 = vsel %vm196, %v514, 0
      %v519 = vsel %vm200, %v512, 0
      %v522 = vsel %vm200, %v511, 0
      %v525 = vsel %vm200, %v510, 0
      %527 = vmatprep.subr.mxu0 %v522
      %528 = vmatpush1.msra.mxu0 %v519
      %529 = vmatprep.subr.mxu0 0.0
      %530 = vmatpush1.msra.mxu0 0.0
      %531 = vmatprep.subr.mxu0 0.0
      %532 = vmatpush1.msra.mxu0 0.0
      %533 = vmatprep.subr.mxu0 0.0
      %534 = vmatpush1.msra.mxu0 0.0
      %535 = vmatprep.subr.mxu0 0.0
      %536 = vmatpush1.msra.mxu0 0.0
      %537 = vmatprep.subr.mxu0 0.0
      %538 = vmatpush1.msra.mxu0 0.0
      %539 = vmatprep.subr.mxu0 0.0
      %540 = vmatpush1.msra.mxu0 0.0
      %541 = vmatprep.subr.mxu0 0.0
      %542 = vmatpush1.msra.mxu0 0.0
      %543 = vmatprep.subr.mxu0 0.0
      %544 = vmatpush1.msra.mxu0 0.0
      %545 = vmatprep.subr.mxu0 0.0
      %546 = vmatpush1.msra.mxu0 0.0
      %547 = vmatprep.subr.mxu0 0.0
      %548 = vmatpush1.msra.mxu0 0.0
      %549 = vmatprep.subr.mxu0 0.0
      %550 = vmatpush1.msra.mxu0 0.0
      %551 = vmatprep.subr.mxu0 0.0
      %552 = vmatpush1.msra.mxu0 0.0
      %553 = vmatprep.subr.mxu0 0.0
      %554 = vmatpush1.msra.mxu0 0.0
      %555 = vmatprep.subr.mxu0 0.0
      %556 = vmatpush1.msra.mxu0 0.0
      %557 = vmatprep.subr.mxu0 0.0
      %558 = vmatpush1.msra.mxu0 0.0
      %559 = vmatprep.subr.mxu0 0.0
      %560 = vmatpush1.msra.mxu0 0.0
      %561 = vmatprep.subr.mxu0 0.0
      %562 = vmatpush1.msra.mxu0 0.0
      %563 = vmatprep.subr.mxu0 0.0
      %564 = vmatpush1.msra.mxu0 0.0
      %565 = vmatprep.subr.mxu0 0.0
      %566 = vmatpush1.msra.mxu0 0.0
      %567 = vmatprep.subr.mxu0 0.0
      %568 = vmatpush1.msra.mxu0 0.0
      %569 = vmatprep.subr.mxu0 0.0
      %570 = vmatpush1.msra.mxu0 0.0
      %571 = vmatprep.subr.mxu0 0.0
      %572 = vmatpush1.msra.mxu0 0.0
      %573 = vmatprep.subr.mxu0 0.0
      %574 = vmatpush1.msra.mxu0 0.0
      %575 = vmatprep.subr.mxu0 0.0
      %576 = vmatpush1.msra.mxu0 0.0
      %577 = vmatprep.subr.mxu0 0.0
      %578 = vmatpush1.msra.mxu0 0.0
      %579 = vmatprep.subr.mxu0 0.0
      %580 = vmatpush1.msra.mxu0 0.0
      %581 = vmatprep.subr.mxu0 0.0
      %582 = vmatpush1.msra.mxu0 0.0
      %583 = vmatprep.subr.mxu0 0.0
      %584 = vmatpush1.msra.mxu0 0.0
      %585 = vmatprep.subr.mxu0 0.0
      %586 = vmatpush1.msra.mxu0 0.0
      %587 = vmatprep.subr.mxu0 0.0
      %588 = vmatpush1.msra.mxu0 0.0
      %589 = vmatprep.subr.mxu0 0.0
      %590 = vmatpush1.msra.mxu0 0.0
      %591 = vmatprep.mubr.f32.mxu0 0.0
      %592 = vmatmul.mubr.f32.gmra.mrb[0].mxu0 %v516
      %v593 = vpop.f32.mrb[0].mxu0
      %v594 = vadd.f32 0.0, %v593
      %v595 = vpop.f32.mrb[0].mxu0
      %v596 = vadd.f32 0.0, %v595
      %597 = vdwg.mxu0
      %598 = vmatprep.subr.mxu0 0.0
      %599 = vmatpush1.msra.mxu0 %v525
      %600 = vmatprep.subr.mxu0 0.0
      %601 = vmatpush1.msra.mxu0 0.0
      %602 = vmatprep.subr.mxu0 0.0
      %603 = vmatpush1.msra.mxu0 0.0
      %604 = vmatprep.subr.mxu0 0.0
      %605 = vmatpush1.msra.mxu0 0.0
      %606 = vmatprep.subr.mxu0 0.0
      %607 = vmatpush1.msra.mxu0 0.0
      %608 = vmatprep.subr.mxu0 0.0
      %609 = vmatpush1.msra.mxu0 0.0
      %610 = vmatprep.subr.mxu0 0.0
      %611 = vmatpush1.msra.mxu0 0.0
      %612 = vmatprep.subr.mxu0 0.0
      %613 = vmatpush1.msra.mxu0 0.0
      %614 = vmatprep.subr.mxu0 0.0
      %615 = vmatpush1.msra.mxu0 0.0
      %616 = vmatprep.subr.mxu0 0.0
      %617 = vmatpush1.msra.mxu0 0.0
      %618 = vmatprep.subr.mxu0 0.0
      %619 = vmatpush1.msra.mxu0 0.0
      %620 = vmatprep.subr.mxu0 0.0
      %621 = vmatpush1.msra.mxu0 0.0
      %622 = vmatprep.subr.mxu0 0.0
      %623 = vmatpush1.msra.mxu0 0.0
      %624 = vmatprep.subr.mxu0 0.0
      %625 = vmatpush1.msra.mxu0 0.0
      %626 = vmatprep.subr.mxu0 0.0
      %627 = vmatpush1.msra.mxu0 0.0
      %628 = vmatprep.subr.mxu0 0.0
      %629 = vmatpush1.msra.mxu0 0.0
      %630 = vmatprep.subr.mxu0 0.0
      %631 = vmatpush1.msra.mxu0 0.0
      %632 = vmatprep.subr.mxu0 0.0
      %633 = vmatpush1.msra.mxu0 0.0
      %634 = vmatprep.subr.mxu0 0.0
      %635 = vmatpush1.msra.mxu0 0.0
      %636 = vmatprep.subr.mxu0 0.0
      %637 = vmatpush1.msra.mxu0 0.0
      %638 = vmatprep.subr.mxu0 0.0
      %639 = vmatpush1.msra.mxu0 0.0
      %640 = vmatprep.subr.mxu0 0.0
      %641 = vmatpush1.msra.mxu0 0.0
      %642 = vmatprep.subr.mxu0 0.0
      %643 = vmatpush1.msra.mxu0 0.0
      %644 = vmatprep.subr.mxu0 0.0
      %645 = vmatpush1.msra.mxu0 0.0
      %646 = vmatprep.subr.mxu0 0.0
      %647 = vmatpush1.msra.mxu0 0.0
      %648 = vmatprep.subr.mxu0 0.0
      %649 = vmatpush1.msra.mxu0 0.0
      %650 = vmatprep.subr.mxu0 0.0
      %651 = vmatpush1.msra.mxu0 0.0
      %652 = vmatprep.subr.mxu0 0.0
      %653 = vmatpush1.msra.mxu0 0.0
      %654 = vmatprep.subr.mxu0 0.0
      %655 = vmatpush1.msra.mxu0 0.0
      %656 = vmatprep.subr.mxu0 0.0
      %657 = vmatpush1.msra.mxu0 0.0
      %658 = vmatprep.subr.mxu0 0.0
      %659 = vmatpush1.msra.mxu0 0.0
      %660 = vmatprep.subr.mxu0 0.0
      %661 = vmatpush1.msra.mxu0 0.0
      %662 = vmatprep.mubr.f32.mxu0 0.0
      %663 = vmatmul.mubr.f32.gmra.mrb[0].mxu0 %v516
      %v664 = vpop.f32.mrb[0].mxu0
      %v665 = vadd.f32 0.0, %v664
      %v666 = vpop.f32.mrb[0].mxu0
      %667 = vdwg.mxu0
      %v668 = vadd.f32 %v427, %v594
      %v669 = vadd.f32 %v429, %v596
      %v670 = vadd.f32 %v498, %v665
      %671 = vrot.lane.b32.xlu0 %v171, 110
      %v672 = vpop.permute.xlu0 %671
      %673 = vrot.lane.b32.xlu0 %v176, 110
      %v674 = vpop.permute.xlu0 %673
      %675 = vrot.lane.b32.xlu0 %v172, 110
      %v676 = vpop.permute.xlu0 %675
      %677 = vrot.lane.b32.xlu0 %v177, 110
      %v678 = vpop.permute.xlu0 %677
      %vm679 = vcmp.lt.s32.totalorder %v189, 110
      %v680 = vsel %vm679, %v676, %v678
      %v681 = vsel %vm679, %v674, %v676
      %v682 = vsel %vm679, %v672, %v674
      %s683 = scalar_lea.vmem %s1, 24
      %v684 = vld [vmem:[%s683] sm:$0xff]
      %v686 = vsel %vm196, %v684, 0
      %v689 = vsel %vm200, %v682, 0
      %v692 = vsel %vm200, %v681, 0
      %v695 = vsel %vm200, %v680, 0
      %697 = vmatprep.subr.mxu0 %v692
      %698 = vmatpush1.msra.mxu0 %v689
      %699 = vmatprep.subr.mxu0 0.0
      %700 = vmatpush1.msra.mxu0 0.0
      %701 = vmatprep.subr.mxu0 0.0
      %702 = vmatpush1.msra.mxu0 0.0
      %703 = vmatprep.subr.mxu0 0.0
      %704 = vmatpush1.msra.mxu0 0.0
      %705 = vmatprep.subr.mxu0 0.0
      %706 = vmatpush1.msra.mxu0 0.0
      %707 = vmatprep.subr.mxu0 0.0
      %708 = vmatpush1.msra.mxu0 0.0
      %709 = vmatprep.subr.mxu0 0.0
      %710 = vmatpush1.msra.mxu0 0.0
      %711 = vmatprep.subr.mxu0 0.0
      %712 = vmatpush1.msra.mxu0 0.0
      %713 = vmatprep.subr.mxu0 0.0
      %714 = vmatpush1.msra.mxu0 0.0
      %715 = vmatprep.subr.mxu0 0.0
      %716 = vmatpush1.msra.mxu0 0.0
      %717 = vmatprep.subr.mxu0 0.0
      %718 = vmatpush1.msra.mxu0 0.0
      %719 = vmatprep.subr.mxu0 0.0
      %720 = vmatpush1.msra.mxu0 0.0
      %721 = vmatprep.subr.mxu0 0.0
      %722 = vmatpush1.msra.mxu0 0.0
      %723 = vmatprep.subr.mxu0 0.0
      %724 = vmatpush1.msra.mxu0 0.0
      %725 = vmatprep.subr.mxu0 0.0
      %726 = vmatpush1.msra.mxu0 0.0
      %727 = vmatprep.subr.mxu0 0.0
      %728 = vmatpush1.msra.mxu0 0.0
      %729 = vmatprep.subr.mxu0 0.0
      %730 = vmatpush1.msra.mxu0 0.0
      %731 = vmatprep.subr.mxu0 0.0
      %732 = vmatpush1.msra.mxu0 0.0
      %733 = vmatprep.subr.mxu0 0.0
      %734 = vmatpush1.msra.mxu0 0.0
      %735 = vmatprep.subr.mxu0 0.0
      %736 = vmatpush1.msra.mxu0 0.0
      %737 = vmatprep.subr.mxu0 0.0
      %738 = vmatpush1.msra.mxu0 0.0
      %739 = vmatprep.subr.mxu0 0.0
      %740 = vmatpush1.msra.mxu0 0.0
      %741 = vmatprep.subr.mxu0 0.0
      %742 = vmatpush1.msra.mxu0 0.0
      %743 = vmatprep.subr.mxu0 0.0
      %744 = vmatpush1.msra.mxu0 0.0
      %745 = vmatprep.subr.mxu0 0.0
      %746 = vmatpush1.msra.mxu0 0.0
      %747 = vmatprep.subr.mxu0 0.0
      %748 = vmatpush1.msra.mxu0 0.0
      %749 = vmatprep.subr.mxu0 0.0
      %750 = vmatpush1.msra.mxu0 0.0
      %751 = vmatprep.subr.mxu0 0.0
      %752 = vmatpush1.msra.mxu0 0.0
      %753 = vmatprep.subr.mxu0 0.0
      %754 = vmatpush1.msra.mxu0 0.0
      %755 = vmatprep.subr.mxu0 0.0
      %756 = vmatpush1.msra.mxu0 0.0
      %757 = vmatprep.subr.mxu0 0.0
      %758 = vmatpush1.msra.mxu0 0.0
      %759 = vmatprep.subr.mxu0 0.0
      %760 = vmatpush1.msra.mxu0 0.0
      %761 = vmatprep.mubr.f32.mxu0 0.0
      %762 = vmatmul.mubr.f32.gmra.mrb[0].mxu0 %v686
      %v763 = vpop.f32.mrb[0].mxu0
      %v764 = vadd.f32 0.0, %v763
      %v765 = vpop.f32.mrb[0].mxu0
      %v766 = vadd.f32 0.0, %v765
      %767 = vdwg.mxu0
      %768 = vmatprep.subr.mxu0 0.0
      %769 = vmatpush1.msra.mxu0 %v695
      %770 = vmatprep.subr.mxu0 0.0
      %771 = vmatpush1.msra.mxu0 0.0
      %772 = vmatprep.subr.mxu0 0.0
      %773 = vmatpush1.msra.mxu0 0.0
      %774 = vmatprep.subr.mxu0 0.0
      %775 = vmatpush1.msra.mxu0 0.0
      %776 = vmatprep.subr.mxu0 0.0
      %777 = vmatpush1.msra.mxu0 0.0
      %778 = vmatprep.subr.mxu0 0.0
      %779 = vmatpush1.msra.mxu0 0.0
      %780 = vmatprep.subr.mxu0 0.0
      %781 = vmatpush1.msra.mxu0 0.0
      %782 = vmatprep.subr.mxu0 0.0
      %783 = vmatpush1.msra.mxu0 0.0
      %784 = vmatprep.subr.mxu0 0.0
      %785 = vmatpush1.msra.mxu0 0.0
      %786 = vmatprep.subr.mxu0 0.0
      %787 = vmatpush1.msra.mxu0 0.0
      %788 = vmatprep.subr.mxu0 0.0
      %789 = vmatpush1.msra.mxu0 0.0
      %790 = vmatprep.subr.mxu0 0.0
      %791 = vmatpush1.msra.mxu0 0.0
      %792 = vmatprep.subr.mxu0 0.0
      %793 = vmatpush1.msra.mxu0 0.0
      %794 = vmatprep.subr.mxu0 0.0
      %795 = vmatpush1.msra.mxu0 0.0
      %796 = vmatprep.subr.mxu0 0.0
      %797 = vmatpush1.msra.mxu0 0.0
      %798 = vmatprep.subr.mxu0 0.0
      %799 = vmatpush1.msra.mxu0 0.0
      %800 = vmatprep.subr.mxu0 0.0
      %801 = vmatpush1.msra.mxu0 0.0
      %802 = vmatprep.subr.mxu0 0.0
      %803 = vmatpush1.msra.mxu0 0.0
      %804 = vmatprep.subr.mxu0 0.0
      %805 = vmatpush1.msra.mxu0 0.0
      %806 = vmatprep.subr.mxu0 0.0
      %807 = vmatpush1.msra.mxu0 0.0
      %808 = vmatprep.subr.mxu0 0.0
      %809 = vmatpush1.msra.mxu0 0.0
      %810 = vmatprep.subr.mxu0 0.0
      %811 = vmatpush1.msra.mxu0 0.0
      %812 = vmatprep.subr.mxu0 0.0
      %813 = vmatpush1.msra.mxu0 0.0
      %814 = vmatprep.subr.mxu0 0.0
      %815 = vmatpush1.msra.mxu0 0.0
      %816 = vmatprep.subr.mxu0 0.0
      %817 = vmatpush1.msra.mxu0 0.0
      %818 = vmatprep.subr.mxu0 0.0
      %819 = vmatpush1.msra.mxu0 0.0
      %820 = vmatprep.subr.mxu0 0.0
      %821 = vmatpush1.msra.mxu0 0.0
      %822 = vmatprep.subr.mxu0 0.0
      %823 = vmatpush1.msra.mxu0 0.0
      %824 = vmatprep.subr.mxu0 0.0
      %825 = vmatpush1.msra.mxu0 0.0
      %826 = vmatprep.subr.mxu0 0.0
      %827 = vmatpush1.msra.mxu0 0.0
      %828 = vmatprep.subr.mxu0 0.0
      %829 = vmatpush1.msra.mxu0 0.0
      %830 = vmatprep.subr.mxu0 0.0
      %831 = vmatpush1.msra.mxu0 0.0
      %832 = vmatprep.mubr.f32.mxu0 0.0
      %833 = vmatmul.mubr.f32.gmra.mrb[0].mxu0 %v686
      %v834 = vpop.f32.mrb[0].mxu0
      %v835 = vadd.f32 0.0, %v834
      %v836 = vpop.f32.mrb[0].mxu0
      %837 = vdwg.mxu0
      %v838 = vadd.f32 %v668, %v764
      %v839 = vadd.f32 %v669, %v766
      %v840 = vadd.f32 %v670, %v835
      %841 = vrot.lane.b32.xlu0 %v171, 109
      %v842 = vpop.permute.xlu0 %841
      %843 = vrot.lane.b32.xlu0 %v176, 109
      %v844 = vpop.permute.xlu0 %843
      %845 = vrot.lane.b32.xlu0 %v172, 109
      %v846 = vpop.permute.xlu0 %845
      %847 = vrot.lane.b32.xlu0 %v177, 109
      %v848 = vpop.permute.xlu0 %847
      %vm849 = vcmp.lt.s32.totalorder %v189, 109
      %v850 = vsel %vm849, %v846, %v848
      %v851 = vsel %vm849, %v844, %v846
      %v852 = vsel %vm849, %v842, %v844
      %s853 = scalar_lea.vmem %s1, 32
      %v854 = vld [vmem:[%s853] sm:$0xff]
      %v856 = vsel %vm196, %v854, 0
      %v859 = vsel %vm200, %v852, 0
      %v862 = vsel %vm200, %v851, 0
      %v865 = vsel %vm200, %v850, 0
      %867 = vmatprep.subr.mxu0 %v862
      %868 = vmatpush1.msra.mxu0 %v859
      %869 = vmatprep.subr.mxu0 0.0
      %870 = vmatpush1.msra.mxu0 0.0
      %871 = vmatprep.subr.mxu0 0.0
      %872 = vmatpush1.msra.mxu0 0.0
      %873 = vmatprep.subr.mxu0 0.0
      %874 = vmatpush1.msra.mxu0 0.0
      %875 = vmatprep.subr.mxu0 0.0
      %876 = vmatpush1.msra.mxu0 0.0
      %877 = vmatprep.subr.mxu0 0.0
      %878 = vmatpush1.msra.mxu0 0.0
      %879 = vmatprep.subr.mxu0 0.0
      %880 = vmatpush1.msra.mxu0 0.0
      %881 = vmatprep.subr.mxu0 0.0
      %882 = vmatpush1.msra.mxu0 0.0
      %883 = vmatprep.subr.mxu0 0.0
      %884 = vmatpush1.msra.mxu0 0.0
      %885 = vmatprep.subr.mxu0 0.0
      %886 = vmatpush1.msra.mxu0 0.0
      %887 = vmatprep.subr.mxu0 0.0
      %888 = vmatpush1.msra.mxu0 0.0
      %889 = vmatprep.subr.mxu0 0.0
      %890 = vmatpush1.msra.mxu0 0.0
      %891 = vmatprep.subr.mxu0 0.0
      %892 = vmatpush1.msra.mxu0 0.0
      %893 = vmatprep.subr.mxu0 0.0
      %894 = vmatpush1.msra.mxu0 0.0
      %895 = vmatprep.subr.mxu0 0.0
      %896 = vmatpush1.msra.mxu0 0.0
      %897 = vmatprep.subr.mxu0 0.0
      %898 = vmatpush1.msra.mxu0 0.0
      %899 = vmatprep.subr.mxu0 0.0
      %900 = vmatpush1.msra.mxu0 0.0
      %901 = vmatprep.subr.mxu0 0.0
      %902 = vmatpush1.msra.mxu0 0.0
      %903 = vmatprep.subr.mxu0 0.0
      %904 = vmatpush1.msra.mxu0 0.0
      %905 = vmatprep.subr.mxu0 0.0
      %906 = vmatpush1.msra.mxu0 0.0
      %907 = vmatprep.subr.mxu0 0.0
      %908 = vmatpush1.msra.mxu0 0.0
      %909 = vmatprep.subr.mxu0 0.0
      %910 = vmatpush1.msra.mxu0 0.0
      %911 = vmatprep.subr.mxu0 0.0
      %912 = vmatpush1.msra.mxu0 0.0
      %913 = vmatprep.subr.mxu0 0.0
      %914 = vmatpush1.msra.mxu0 0.0
      %915 = vmatprep.subr.mxu0 0.0
      %916 = vmatpush1.msra.mxu0 0.0
      %917 = vmatprep.subr.mxu0 0.0
      %918 = vmatpush1.msra.mxu0 0.0
      %919 = vmatprep.subr.mxu0 0.0
      %920 = vmatpush1.msra.mxu0 0.0
      %921 = vmatprep.subr.mxu0 0.0
      %922 = vmatpush1.msra.mxu0 0.0
      %923 = vmatprep.subr.mxu0 0.0
      %924 = vmatpush1.msra.mxu0 0.0
      %925 = vmatprep.subr.mxu0 0.0
      %926 = vmatpush1.msra.mxu0 0.0
      %927 = vmatprep.subr.mxu0 0.0
      %928 = vmatpush1.msra.mxu0 0.0
      %929 = vmatprep.subr.mxu0 0.0
      %930 = vmatpush1.msra.mxu0 0.0
      %931 = vmatprep.mubr.f32.mxu0 0.0
      %932 = vmatmul.mubr.f32.gmra.mrb[0].mxu0 %v856
      %v933 = vpop.f32.mrb[0].mxu0
      %v934 = vadd.f32 0.0, %v933
      %v935 = vpop.f32.mrb[0].mxu0
      %v936 = vadd.f32 0.0, %v935
      %937 = vdwg.mxu0
      %938 = vmatprep.subr.mxu0 0.0
      %939 = vmatpush1.msra.mxu0 %v865
      %940 = vmatprep.subr.mxu0 0.0
      %941 = vmatpush1.msra.mxu0 0.0
      %942 = vmatprep.subr.mxu0 0.0
      %943 = vmatpush1.msra.mxu0 0.0
      %944 = vmatprep.subr.mxu0 0.0
      %945 = vmatpush1.msra.mxu0 0.0
      %946 = vmatprep.subr.mxu0 0.0
      %947 = vmatpush1.msra.mxu0 0.0
      %948 = vmatprep.subr.mxu0 0.0
      %949 = vmatpush1.msra.mxu0 0.0
      %950 = vmatprep.subr.mxu0 0.0
      %951 = vmatpush1.msra.mxu0 0.0
      %952 = vmatprep.subr.mxu0 0.0
      %953 = vmatpush1.msra.mxu0 0.0
      %954 = vmatprep.subr.mxu0 0.0
      %955 = vmatpush1.msra.mxu0 0.0
      %956 = vmatprep.subr.mxu0 0.0
      %957 = vmatpush1.msra.mxu0 0.0
      %958 = vmatprep.subr.mxu0 0.0
      %959 = vmatpush1.msra.mxu0 0.0
      %960 = vmatprep.subr.mxu0 0.0
      %961 = vmatpush1.msra.mxu0 0.0
      %962 = vmatprep.subr.mxu0 0.0
      %963 = vmatpush1.msra.mxu0 0.0
      %964 = vmatprep.subr.mxu0 0.0
      %965 = vmatpush1.msra.mxu0 0.0
      %966 = vmatprep.subr.mxu0 0.0
      %967 = vmatpush1.msra.mxu0 0.0
      %968 = vmatprep.subr.mxu0 0.0
      %969 = vmatpush1.msra.mxu0 0.0
      %970 = vmatprep.subr.mxu0 0.0
      %971 = vmatpush1.msra.mxu0 0.0
      %972 = vmatprep.subr.mxu0 0.0
      %973 = vmatpush1.msra.mxu0 0.0
      %974 = vmatprep.subr.mxu0 0.0
      %975 = vmatpush1.msra.mxu0 0.0
      %976 = vmatprep.subr.mxu0 0.0
      %977 = vmatpush1.msra.mxu0 0.0
      %978 = vmatprep.subr.mxu0 0.0
      %979 = vmatpush1.msra.mxu0 0.0
      %980 = vmatprep.subr.mxu0 0.0
      %981 = vmatpush1.msra.mxu0 0.0
      %982 = vmatprep.subr.mxu0 0.0
      %983 = vmatpush1.msra.mxu0 0.0
      %984 = vmatprep.subr.mxu0 0.0
      %985 = vmatpush1.msra.mxu0 0.0
      %986 = vmatprep.subr.mxu0 0.0
      %987 = vmatpush1.msra.mxu0 0.0
      %988 = vmatprep.subr.mxu0 0.0
      %989 = vmatpush1.msra.mxu0 0.0
      %990 = vmatprep.subr.mxu0 0.0
      %991 = vmatpush1.msra.mxu0 0.0
      %992 = vmatprep.subr.mxu0 0.0
      %993 = vmatpush1.msra.mxu0 0.0
      %994 = vmatprep.subr.mxu0 0.0
      %995 = vmatpush1.msra.mxu0 0.0
      %996 = vmatprep.subr.mxu0 0.0
      %997 = vmatpush1.msra.mxu0 0.0
      %998 = vmatprep.subr.mxu0 0.0
      %999 = vmatpush1.msra.mxu0 0.0
      %1000 = vmatprep.subr.mxu0 0.0
      %1001 = vmatpush1.msra.mxu0 0.0
      %1002 = vmatprep.mubr.f32.mxu0 0.0
      %1003 = vmatmul.mubr.f32.gmra.mrb[0].mxu0 %v856
      %v1004 = vpop.f32.mrb[0].mxu0
      %v1005 = vadd.f32 0.0, %v1004
      %v1006 = vpop.f32.mrb[0].mxu0
      %1007 = vdwg.mxu0
      %v1008 = vadd.f32 %v838, %v934
      %v1009 = vadd.f32 %v839, %v936
      %v1010 = vadd.f32 %v840, %v1005
      %1011 = vrot.lane.b32.xlu0 %v171, 108
      %v1012 = vpop.permute.xlu0 %1011
      %1013 = vrot.lane.b32.xlu0 %v176, 108
      %v1014 = vpop.permute.xlu0 %1013
      %1015 = vrot.lane.b32.xlu0 %v172, 108
      %v1016 = vpop.permute.xlu0 %1015
      %1017 = vrot.lane.b32.xlu0 %v177, 108
      %v1018 = vpop.permute.xlu0 %1017
      %vm1019 = vcmp.lt.s32.totalorder %v189, 108
      %v1020 = vsel %vm1019, %v1016, %v1018
      %v1021 = vsel %vm1019, %v1014, %v1016
      %v1022 = vsel %vm1019, %v1012, %v1014
      %s1023 = scalar_lea.vmem %s1, 40
      %v1024 = vld [vmem:[%s1023] sm:$0xff]
      %v1026 = vsel %vm196, %v1024, 0
      %v1029 = vsel %vm200, %v1022, 0
      %v1032 = vsel %vm200, %v1021, 0
      %v1035 = vsel %vm200, %v1020, 0
      %1037 = vmatprep.subr.mxu0 %v1032
      %1038 = vmatpush1.msra.mxu0 %v1029
      %1039 = vmatprep.subr.mxu0 0.0
      %1040 = vmatpush1.msra.mxu0 0.0
      %1041 = vmatprep.subr.mxu0 0.0
      %1042 = vmatpush1.msra.mxu0 0.0
      %1043 = vmatprep.subr.mxu0 0.0
      %1044 = vmatpush1.msra.mxu0 0.0
      %1045 = vmatprep.subr.mxu0 0.0
      %1046 = vmatpush1.msra.mxu0 0.0
      %1047 = vmatprep.subr.mxu0 0.0
      %1048 = vmatpush1.msra.mxu0 0.0
      %1049 = vmatprep.subr.mxu0 0.0
      %1050 = vmatpush1.msra.mxu0 0.0
      %1051 = vmatprep.subr.mxu0 0.0
      %1052 = vmatpush1.msra.mxu0 0.0
      %1053 = vmatprep.subr.mxu0 0.0
      %1054 = vmatpush1.msra.mxu0 0.0
      %1055 = vmatprep.subr.mxu0 0.0
      %1056 = vmatpush1.msra.mxu0 0.0
      %1057 = vmatprep.subr.mxu0 0.0
      %1058 = vmatpush1.msra.mxu0 0.0
      %1059 = vmatprep.subr.mxu0 0.0
      %1060 = vmatpush1.msra.mxu0 0.0
      %1061 = vmatprep.subr.mxu0 0.0
      %1062 = vmatpush1.msra.mxu0 0.0
      %1063 = vmatprep.subr.mxu0 0.0
      %1064 = vmatpush1.msra.mxu0 0.0
      %1065 = vmatprep.subr.mxu0 0.0
      %1066 = vmatpush1.msra.mxu0 0.0
      %1067 = vmatprep.subr.mxu0 0.0
      %1068 = vmatpush1.msra.mxu0 0.0
      %1069 = vmatprep.subr.mxu0 0.0
      %1070 = vmatpush1.msra.mxu0 0.0
      %1071 = vmatprep.subr.mxu0 0.0
      %1072 = vmatpush1.msra.mxu0 0.0
      %1073 = vmatprep.subr.mxu0 0.0
      %1074 = vmatpush1.msra.mxu0 0.0
      %1075 = vmatprep.subr.mxu0 0.0
      %1076 = vmatpush1.msra.mxu0 0.0
      %1077 = vmatprep.subr.mxu0 0.0
      %1078 = vmatpush1.msra.mxu0 0.0
      %1079 = vmatprep.subr.mxu0 0.0
      %1080 = vmatpush1.msra.mxu0 0.0
      %1081 = vmatprep.subr.mxu0 0.0
      %1082 = vmatpush1.msra.mxu0 0.0
      %1083 = vmatprep.subr.mxu0 0.0
      %1084 = vmatpush1.msra.mxu0 0.0
      %1085 = vmatprep.subr.mxu0 0.0
      %1086 = vmatpush1.msra.mxu0 0.0
      %1087 = vmatprep.subr.mxu0 0.0
      %1088 = vmatpush1.msra.mxu0 0.0
      %1089 = vmatprep.subr.mxu0 0.0
      %1090 = vmatpush1.msra.mxu0 0.0
      %1091 = vmatprep.subr.mxu0 0.0
      %1092 = vmatpush1.msra.mxu0 0.0
      %1093 = vmatprep.subr.mxu0 0.0
      %1094 = vmatpush1.msra.mxu0 0.0
      %1095 = vmatprep.subr.mxu0 0.0
      %1096 = vmatpush1.msra.mxu0 0.0
      %1097 = vmatprep.subr.mxu0 0.0
      %1098 = vmatpush1.msra.mxu0 0.0
      %1099 = vmatprep.subr.mxu0 0.0
      %1100 = vmatpush1.msra.mxu0 0.0
      %1101 = vmatprep.mubr.f32.mxu0 0.0
      %1102 = vmatmul.mubr.f32.gmra.mrb[0].mxu0 %v1026
      %v1103 = vpop.f32.mrb[0].mxu0
      %v1104 = vadd.f32 0.0, %v1103
      %v1105 = vpop.f32.mrb[0].mxu0
      %v1106 = vadd.f32 0.0, %v1105
      %1107 = vdwg.mxu0
      %1108 = vmatprep.subr.mxu0 0.0
      %1109 = vmatpush1.msra.mxu0 %v1035
      %1110 = vmatprep.subr.mxu0 0.0
      %1111 = vmatpush1.msra.mxu0 0.0
      %1112 = vmatprep.subr.mxu0 0.0
      %1113 = vmatpush1.msra.mxu0 0.0
      %1114 = vmatprep.subr.mxu0 0.0
      %1115 = vmatpush1.msra.mxu0 0.0
      %1116 = vmatprep.subr.mxu0 0.0
      %1117 = vmatpush1.msra.mxu0 0.0
      %1118 = vmatprep.subr.mxu0 0.0
      %1119 = vmatpush1.msra.mxu0 0.0
      %1120 = vmatprep.subr.mxu0 0.0
      %1121 = vmatpush1.msra.mxu0 0.0
      %1122 = vmatprep.subr.mxu0 0.0
      %1123 = vmatpush1.msra.mxu0 0.0
      %1124 = vmatprep.subr.mxu0 0.0
      %1125 = vmatpush1.msra.mxu0 0.0
      %1126 = vmatprep.subr.mxu0 0.0
      %1127 = vmatpush1.msra.mxu0 0.0
      %1128 = vmatprep.subr.mxu0 0.0
      %1129 = vmatpush1.msra.mxu0 0.0
      %1130 = vmatprep.subr.mxu0 0.0
      %1131 = vmatpush1.msra.mxu0 0.0
      %1132 = vmatprep.subr.mxu0 0.0
      %1133 = vmatpush1.msra.mxu0 0.0
      %1134 = vmatprep.subr.mxu0 0.0
      %1135 = vmatpush1.msra.mxu0 0.0
      %1136 = vmatprep.subr.mxu0 0.0
      %1137 = vmatpush1.msra.mxu0 0.0
      %1138 = vmatprep.subr.mxu0 0.0
      %1139 = vmatpush1.msra.mxu0 0.0
      %1140 = vmatprep.subr.mxu0 0.0
      %1141 = vmatpush1.msra.mxu0 0.0
      %1142 = vmatprep.subr.mxu0 0.0
      %1143 = vmatpush1.msra.mxu0 0.0
      %1144 = vmatprep.subr.mxu0 0.0
      %1145 = vmatpush1.msra.mxu0 0.0
      %1146 = vmatprep.subr.mxu0 0.0
      %1147 = vmatpush1.msra.mxu0 0.0
      %1148 = vmatprep.subr.mxu0 0.0
      %1149 = vmatpush1.msra.mxu0 0.0
      %1150 = vmatprep.subr.mxu0 0.0
      %1151 = vmatpush1.msra.mxu0 0.0
      %1152 = vmatprep.subr.mxu0 0.0
      %1153 = vmatpush1.msra.mxu0 0.0
      %1154 = vmatprep.subr.mxu0 0.0
      %1155 = vmatpush1.msra.mxu0 0.0
      %1156 = vmatprep.subr.mxu0 0.0
      %1157 = vmatpush1.msra.mxu0 0.0
      %1158 = vmatprep.subr.mxu0 0.0
      %1159 = vmatpush1.msra.mxu0 0.0
      %1160 = vmatprep.subr.mxu0 0.0
      %1161 = vmatpush1.msra.mxu0 0.0
      %1162 = vmatprep.subr.mxu0 0.0
      %1163 = vmatpush1.msra.mxu0 0.0
      %1164 = vmatprep.subr.mxu0 0.0
      %1165 = vmatpush1.msra.mxu0 0.0
      %1166 = vmatprep.subr.mxu0 0.0
      %1167 = vmatpush1.msra.mxu0 0.0
      %1168 = vmatprep.subr.mxu0 0.0
      %1169 = vmatpush1.msra.mxu0 0.0
      %1170 = vmatprep.subr.mxu0 0.0
      %1171 = vmatpush1.msra.mxu0 0.0
      %1172 = vmatprep.mubr.f32.mxu0 0.0
      %1173 = vmatmul.mubr.f32.gmra.mrb[0].mxu0 %v1026
      %v1174 = vpop.f32.mrb[0].mxu0
      %v1175 = vadd.f32 0.0, %v1174
      %v1176 = vpop.f32.mrb[0].mxu0
      %1177 = vdwg.mxu0
      %v1178 = vadd.f32 %v1008, %v1104
      %v1179 = vadd.f32 %v1009, %v1106
      %v1180 = vadd.f32 %v1010, %v1175
      %1181 = vrot.lane.b32.xlu0 %v171, 92
      %v1182 = vpop.permute.xlu0 %1181
      %1183 = vrot.lane.b32.xlu0 %v176, 92
      %v1184 = vpop.permute.xlu0 %1183
      %1185 = vrot.lane.b32.xlu0 %v172, 92
      %v1186 = vpop.permute.xlu0 %1185
      %1187 = vrot.lane.b32.xlu0 %v177, 92
      %v1188 = vpop.permute.xlu0 %1187
      %vm1189 = vcmp.lt.s32.totalorder %v189, 92
      %v1190 = vsel %vm1189, %v1186, %v1188
      %v1191 = vsel %vm1189, %v1184, %v1186
      %v1192 = vsel %vm1189, %v1182, %v1184
      %s1193 = scalar_lea.vmem %s1, 48
      %v1194 = vld [vmem:[%s1193] sm:$0xff]
      %v1196 = vsel %vm196, %v1194, 0
      %v1199 = vsel %vm200, %v1192, 0
      %v1202 = vsel %vm200, %v1191, 0
      %v1205 = vsel %vm200, %v1190, 0
      %1207 = vmatprep.subr.mxu0 %v1202
      %1208 = vmatpush1.msra.mxu0 %v1199
      %1209 = vmatprep.subr.mxu0 0.0
      %1210 = vmatpush1.msra.mxu0 0.0
      %1211 = vmatprep.subr.mxu0 0.0
      %1212 = vmatpush1.msra.mxu0 0.0
      %1213 = vmatprep.subr.mxu0 0.0
      %1214 = vmatpush1.msra.mxu0 0.0
      %1215 = vmatprep.subr.mxu0 0.0
      %1216 = vmatpush1.msra.mxu0 0.0
      %1217 = vmatprep.subr.mxu0 0.0
      %1218 = vmatpush1.msra.mxu0 0.0
      %1219 = vmatprep.subr.mxu0 0.0
      %1220 = vmatpush1.msra.mxu0 0.0
      %1221 = vmatprep.subr.mxu0 0.0
      %1222 = vmatpush1.msra.mxu0 0.0
      %1223 = vmatprep.subr.mxu0 0.0
      %1224 = vmatpush1.msra.mxu0 0.0
      %1225 = vmatprep.subr.mxu0 0.0
      %1226 = vmatpush1.msra.mxu0 0.0
      %1227 = vmatprep.subr.mxu0 0.0
      %1228 = vmatpush1.msra.mxu0 0.0
      %1229 = vmatprep.subr.mxu0 0.0
      %1230 = vmatpush1.msra.mxu0 0.0
      %1231 = vmatprep.subr.mxu0 0.0
      %1232 = vmatpush1.msra.mxu0 0.0
      %1233 = vmatprep.subr.mxu0 0.0
      %1234 = vmatpush1.msra.mxu0 0.0
      %1235 = vmatprep.subr.mxu0 0.0
      %1236 = vmatpush1.msra.mxu0 0.0
      %1237 = vmatprep.subr.mxu0 0.0
      %1238 = vmatpush1.msra.mxu0 0.0
      %1239 = vmatprep.subr.mxu0 0.0
      %1240 = vmatpush1.msra.mxu0 0.0
      %1241 = vmatprep.subr.mxu0 0.0
      %1242 = vmatpush1.msra.mxu0 0.0
      %1243 = vmatprep.subr.mxu0 0.0
      %1244 = vmatpush1.msra.mxu0 0.0
      %1245 = vmatprep.subr.mxu0 0.0
      %1246 = vmatpush1.msra.mxu0 0.0
      %1247 = vmatprep.subr.mxu0 0.0
      %1248 = vmatpush1.msra.mxu0 0.0
      %1249 = vmatprep.subr.mxu0 0.0
      %1250 = vmatpush1.msra.mxu0 0.0
      %1251 = vmatprep.subr.mxu0 0.0
      %1252 = vmatpush1.msra.mxu0 0.0
      %1253 = vmatprep.subr.mxu0 0.0
      %1254 = vmatpush1.msra.mxu0 0.0
      %1255 = vmatprep.subr.mxu0 0.0
      %1256 = vmatpush1.msra.mxu0 0.0
      %1257 = vmatprep.subr.mxu0 0.0
      %1258 = vmatpush1.msra.mxu0 0.0
      %1259 = vmatprep.subr.mxu0 0.0
      %1260 = vmatpush1.msra.mxu0 0.0
      %1261 = vmatprep.subr.mxu0 0.0
      %1262 = vmatpush1.msra.mxu0 0.0
      %1263 = vmatprep.subr.mxu0 0.0
      %1264 = vmatpush1.msra.mxu0 0.0
      %1265 = vmatprep.subr.mxu0 0.0
      %1266 = vmatpush1.msra.mxu0 0.0
      %1267 = vmatprep.subr.mxu0 0.0
      %1268 = vmatpush1.msra.mxu0 0.0
      %1269 = vmatprep.subr.mxu0 0.0
      %1270 = vmatpush1.msra.mxu0 0.0
      %1271 = vmatprep.mubr.f32.mxu0 0.0
      %1272 = vmatmul.mubr.f32.gmra.mrb[0].mxu0 %v1196
      %v1273 = vpop.f32.mrb[0].mxu0
      %v1274 = vadd.f32 0.0, %v1273
      %v1275 = vpop.f32.mrb[0].mxu0
      %v1276 = vadd.f32 0.0, %v1275
      %1277 = vdwg.mxu0
      %1278 = vmatprep.subr.mxu0 0.0
      %1279 = vmatpush1.msra.mxu0 %v1205
      %1280 = vmatprep.subr.mxu0 0.0
      %1281 = vmatpush1.msra.mxu0 0.0
      %1282 = vmatprep.subr.mxu0 0.0
      %1283 = vmatpush1.msra.mxu0 0.0
      %1284 = vmatprep.subr.mxu0 0.0
      %1285 = vmatpush1.msra.mxu0 0.0
      %1286 = vmatprep.subr.mxu0 0.0
      %1287 = vmatpush1.msra.mxu0 0.0
      %1288 = vmatprep.subr.mxu0 0.0
      %1289 = vmatpush1.msra.mxu0 0.0
      %1290 = vmatprep.subr.mxu0 0.0
      %1291 = vmatpush1.msra.mxu0 0.0
      %1292 = vmatprep.subr.mxu0 0.0
      %1293 = vmatpush1.msra.mxu0 0.0
      %1294 = vmatprep.subr.mxu0 0.0
      %1295 = vmatpush1.msra.mxu0 0.0
      %1296 = vmatprep.subr.mxu0 0.0
      %1297 = vmatpush1.msra.mxu0 0.0
      %1298 = vmatprep.subr.mxu0 0.0
      %1299 = vmatpush1.msra.mxu0 0.0
      %1300 = vmatprep.subr.mxu0 0.0
      %1301 = vmatpush1.msra.mxu0 0.0
      %1302 = vmatprep.subr.mxu0 0.0
      %1303 = vmatpush1.msra.mxu0 0.0
      %1304 = vmatprep.subr.mxu0 0.0
      %1305 = vmatpush1.msra.mxu0 0.0
      %1306 = vmatprep.subr.mxu0 0.0
      %1307 = vmatpush1.msra.mxu0 0.0
      %1308 = vmatprep.subr.mxu0 0.0
      %1309 = vmatpush1.msra.mxu0 0.0
      %1310 = vmatprep.subr.mxu0 0.0
      %1311 = vmatpush1.msra.mxu0 0.0
      %1312 = vmatprep.subr.mxu0 0.0
      %1313 = vmatpush1.msra.mxu0 0.0
      %1314 = vmatprep.subr.mxu0 0.0
      %1315 = vmatpush1.msra.mxu0 0.0
      %1316 = vmatprep.subr.mxu0 0.0
      %1317 = vmatpush1.msra.mxu0 0.0
      %1318 = vmatprep.subr.mxu0 0.0
      %1319 = vmatpush1.msra.mxu0 0.0
      %1320 = vmatprep.subr.mxu0 0.0
      %1321 = vmatpush1.msra.mxu0 0.0
      %1322 = vmatprep.subr.mxu0 0.0
      %1323 = vmatpush1.msra.mxu0 0.0
      %1324 = vmatprep.subr.mxu0 0.0
      %1325 = vmatpush1.msra.mxu0 0.0
      %1326 = vmatprep.subr.mxu0 0.0
      %1327 = vmatpush1.msra.mxu0 0.0
      %1328 = vmatprep.subr.mxu0 0.0
      %1329 = vmatpush1.msra.mxu0 0.0
      %1330 = vmatprep.subr.mxu0 0.0
      %1331 = vmatpush1.msra.mxu0 0.0
      %1332 = vmatprep.subr.mxu0 0.0
      %1333 = vmatpush1.msra.mxu0 0.0
      %1334 = vmatprep.subr.mxu0 0.0
      %1335 = vmatpush1.msra.mxu0 0.0
      %1336 = vmatprep.subr.mxu0 0.0
      %1337 = vmatpush1.msra.mxu0 0.0
      %1338 = vmatprep.subr.mxu0 0.0
      %1339 = vmatpush1.msra.mxu0 0.0
      %1340 = vmatprep.subr.mxu0 0.0
      %1341 = vmatpush1.msra.mxu0 0.0
      %1342 = vmatprep.mubr.f32.mxu0 0.0
      %1343 = vmatmul.mubr.f32.gmra.mrb[0].mxu0 %v1196
      %v1344 = vpop.f32.mrb[0].mxu0
      %v1345 = vadd.f32 0.0, %v1344
      %v1346 = vpop.f32.mrb[0].mxu0
      %1347 = vdwg.mxu0
      %v1348 = vadd.f32 %v1178, %v1274
      %v1349 = vadd.f32 %v1179, %v1276
      %v1350 = vadd.f32 %v1180, %v1345
      %1351 = vrot.lane.b32.xlu0 %v171, 91
      %v1352 = vpop.permute.xlu0 %1351
      %1353 = vrot.lane.b32.xlu0 %v176, 91
      %v1354 = vpop.permute.xlu0 %1353
      %1355 = vrot.lane.b32.xlu0 %v172, 91
      %v1356 = vpop.permute.xlu0 %1355
      %1357 = vrot.lane.b32.xlu0 %v177, 91
      %v1358 = vpop.permute.xlu0 %1357
      %vm1359 = vcmp.lt.s32.totalorder %v189, 91
      %v1360 = vsel %vm1359, %v1356, %v1358
      %v1361 = vsel %vm1359, %v1354, %v1356
      %v1362 = vsel %vm1359, %v1352, %v1354
      %s1363 = scalar_lea.vmem %s1, 56
      %v1364 = vld [vmem:[%s1363] sm:$0xff]
      %v1366 = vsel %vm196, %v1364, 0
      %v1369 = vsel %vm200, %v1362, 0
      %v1372 = vsel %vm200, %v1361, 0
      %v1375 = vsel %vm200, %v1360, 0
      %1377 = vmatprep.subr.mxu0 %v1372
      %1378 = vmatpush1.msra.mxu0 %v1369
      %1379 = vmatprep.subr.mxu0 0.0
      %1380 = vmatpush1.msra.mxu0 0.0
      %1381 = vmatprep.subr.mxu0 0.0
      %1382 = vmatpush1.msra.mxu0 0.0
      %1383 = vmatprep.subr.mxu0 0.0
      %1384 = vmatpush1.msra.mxu0 0.0
      %1385 = vmatprep.subr.mxu0 0.0
      %1386 = vmatpush1.msra.mxu0 0.0
      %1387 = vmatprep.subr.mxu0 0.0
      %1388 = vmatpush1.msra.mxu0 0.0
      %1389 = vmatprep.subr.mxu0 0.0
      %1390 = vmatpush1.msra.mxu0 0.0
      %1391 = vmatprep.subr.mxu0 0.0
      %1392 = vmatpush1.msra.mxu0 0.0
      %1393 = vmatprep.subr.mxu0 0.0
      %1394 = vmatpush1.msra.mxu0 0.0
      %1395 = vmatprep.subr.mxu0 0.0
      %1396 = vmatpush1.msra.mxu0 0.0
      %1397 = vmatprep.subr.mxu0 0.0
      %1398 = vmatpush1.msra.mxu0 0.0
      %1399 = vmatprep.subr.mxu0 0.0
      %1400 = vmatpush1.msra.mxu0 0.0
      %1401 = vmatprep.subr.mxu0 0.0
      %1402 = vmatpush1.msra.mxu0 0.0
      %1403 = vmatprep.subr.mxu0 0.0
      %1404 = vmatpush1.msra.mxu0 0.0
      %1405 = vmatprep.subr.mxu0 0.0
      %1406 = vmatpush1.msra.mxu0 0.0
      %1407 = vmatprep.subr.mxu0 0.0
      %1408 = vmatpush1.msra.mxu0 0.0
      %1409 = vmatprep.subr.mxu0 0.0
      %1410 = vmatpush1.msra.mxu0 0.0
      %1411 = vmatprep.subr.mxu0 0.0
      %1412 = vmatpush1.msra.mxu0 0.0
      %1413 = vmatprep.subr.mxu0 0.0
      %1414 = vmatpush1.msra.mxu0 0.0
      %1415 = vmatprep.subr.mxu0 0.0
      %1416 = vmatpush1.msra.mxu0 0.0
      %1417 = vmatprep.subr.mxu0 0.0
      %1418 = vmatpush1.msra.mxu0 0.0
      %1419 = vmatprep.subr.mxu0 0.0
      %1420 = vmatpush1.msra.mxu0 0.0
      %1421 = vmatprep.subr.mxu0 0.0
      %1422 = vmatpush1.msra.mxu0 0.0
      %1423 = vmatprep.subr.mxu0 0.0
      %1424 = vmatpush1.msra.mxu0 0.0
      %1425 = vmatprep.subr.mxu0 0.0
      %1426 = vmatpush1.msra.mxu0 0.0
      %1427 = vmatprep.subr.mxu0 0.0
      %1428 = vmatpush1.msra.mxu0 0.0
      %1429 = vmatprep.subr.mxu0 0.0
      %1430 = vmatpush1.msra.mxu0 0.0
      %1431 = vmatprep.subr.mxu0 0.0
      %1432 = vmatpush1.msra.mxu0 0.0
      %1433 = vmatprep.subr.mxu0 0.0
      %1434 = vmatpush1.msra.mxu0 0.0
      %1435 = vmatprep.subr.mxu0 0.0
      %1436 = vmatpush1.msra.mxu0 0.0
      %1437 = vmatprep.subr.mxu0 0.0
      %1438 = vmatpush1.msra.mxu0 0.0
      %1439 = vmatprep.subr.mxu0 0.0
      %1440 = vmatpush1.msra.mxu0 0.0
      %1441 = vmatprep.mubr.f32.mxu0 0.0
      %1442 = vmatmul.mubr.f32.gmra.mrb[0].mxu0 %v1366
      %v1443 = vpop.f32.mrb[0].mxu0
      %v1444 = vadd.f32 0.0, %v1443
      %v1445 = vpop.f32.mrb[0].mxu0
      %v1446 = vadd.f32 0.0, %v1445
      %1447 = vdwg.mxu0
      %1448 = vmatprep.subr.mxu0 0.0
      %1449 = vmatpush1.msra.mxu0 %v1375
      %1450 = vmatprep.subr.mxu0 0.0
      %1451 = vmatpush1.msra.mxu0 0.0
      %1452 = vmatprep.subr.mxu0 0.0
      %1453 = vmatpush1.msra.mxu0 0.0
      %1454 = vmatprep.subr.mxu0 0.0
      %1455 = vmatpush1.msra.mxu0 0.0
      %1456 = vmatprep.subr.mxu0 0.0
      %1457 = vmatpush1.msra.mxu0 0.0
      %1458 = vmatprep.subr.mxu0 0.0
      %1459 = vmatpush1.msra.mxu0 0.0
      %1460 = vmatprep.subr.mxu0 0.0
      %1461 = vmatpush1.msra.mxu0 0.0
      %1462 = vmatprep.subr.mxu0 0.0
      %1463 = vmatpush1.msra.mxu0 0.0
      %1464 = vmatprep.subr.mxu0 0.0
      %1465 = vmatpush1.msra.mxu0 0.0
      %1466 = vmatprep.subr.mxu0 0.0
      %1467 = vmatpush1.msra.mxu0 0.0
      %1468 = vmatprep.subr.mxu0 0.0
      %1469 = vmatpush1.msra.mxu0 0.0
      %1470 = vmatprep.subr.mxu0 0.0
      %1471 = vmatpush1.msra.mxu0 0.0
      %1472 = vmatprep.subr.mxu0 0.0
      %1473 = vmatpush1.msra.mxu0 0.0
      %1474 = vmatprep.subr.mxu0 0.0
      %1475 = vmatpush1.msra.mxu0 0.0
      %1476 = vmatprep.subr.mxu0 0.0
      %1477 = vmatpush1.msra.mxu0 0.0
      %1478 = vmatprep.subr.mxu0 0.0
      %1479 = vmatpush1.msra.mxu0 0.0
      %1480 = vmatprep.subr.mxu0 0.0
      %1481 = vmatpush1.msra.mxu0 0.0
      %1482 = vmatprep.subr.mxu0 0.0
      %1483 = vmatpush1.msra.mxu0 0.0
      %1484 = vmatprep.subr.mxu0 0.0
      %1485 = vmatpush1.msra.mxu0 0.0
      %1486 = vmatprep.subr.mxu0 0.0
      %1487 = vmatpush1.msra.mxu0 0.0
      %1488 = vmatprep.subr.mxu0 0.0
      %1489 = vmatpush1.msra.mxu0 0.0
      %1490 = vmatprep.subr.mxu0 0.0
      %1491 = vmatpush1.msra.mxu0 0.0
      %1492 = vmatprep.subr.mxu0 0.0
      %1493 = vmatpush1.msra.mxu0 0.0
      %1494 = vmatprep.subr.mxu0 0.0
      %1495 = vmatpush1.msra.mxu0 0.0
      %1496 = vmatprep.subr.mxu0 0.0
      %1497 = vmatpush1.msra.mxu0 0.0
      %1498 = vmatprep.subr.mxu0 0.0
      %1499 = vmatpush1.msra.mxu0 0.0
      %1500 = vmatprep.subr.mxu0 0.0
      %1501 = vmatpush1.msra.mxu0 0.0
      %1502 = vmatprep.subr.mxu0 0.0
      %1503 = vmatpush1.msra.mxu0 0.0
      %1504 = vmatprep.subr.mxu0 0.0
      %1505 = vmatpush1.msra.mxu0 0.0
      %1506 = vmatprep.subr.mxu0 0.0
      %1507 = vmatpush1.msra.mxu0 0.0
      %1508 = vmatprep.subr.mxu0 0.0
      %1509 = vmatpush1.msra.mxu0 0.0
      %1510 = vmatprep.subr.mxu0 0.0
      %1511 = vmatpush1.msra.mxu0 0.0
      %1512 = vmatprep.mubr.f32.mxu0 0.0
      %1513 = vmatmul.mubr.f32.gmra.mrb[0].mxu0 %v1366
      %v1514 = vpop.f32.mrb[0].mxu0
      %v1515 = vadd.f32 0.0, %v1514
      %v1516 = vpop.f32.mrb[0].mxu0
      %1517 = vdwg.mxu0
      %v1518 = vadd.f32 %v1348, %v1444
      %v1519 = vadd.f32 %v1349, %v1446
      %v1520 = vadd.f32 %v1350, %v1515
      %1521 = vrot.lane.b32.xlu0 %v171, 90
      %v1522 = vpop.permute.xlu0 %1521
      %1523 = vrot.lane.b32.xlu0 %v176, 90
      %v1524 = vpop.permute.xlu0 %1523
      %1525 = vrot.lane.b32.xlu0 %v172, 90
      %v1526 = vpop.permute.xlu0 %1525
      %1527 = vrot.lane.b32.xlu0 %v177, 90
      %v1528 = vpop.permute.xlu0 %1527
      %vm1529 = vcmp.lt.s32.totalorder %v189, 90
      %v1530 = vsel %vm1529, %v1526, %v1528
      %v1531 = vsel %vm1529, %v1524, %v1526
      %v1532 = vsel %vm1529, %v1522, %v1524
      %s1533 = scalar_lea.vmem %s1, 64
      %v1534 = vld [vmem:[%s1533] sm:$0xff]
      %v1536 = vsel %vm196, %v1534, 0
      %v1539 = vsel %vm200, %v1532, 0
      %v1542 = vsel %vm200, %v1531, 0
      %v1545 = vsel %vm200, %v1530, 0
      %1547 = vmatprep.subr.mxu0 %v1542
      %1548 = vmatpush1.msra.mxu0 %v1539
      %1549 = vmatprep.subr.mxu0 0.0
      %1550 = vmatpush1.msra.mxu0 0.0
      %1551 = vmatprep.subr.mxu0 0.0
      %1552 = vmatpush1.msra.mxu0 0.0
      %1553 = vmatprep.subr.mxu0 0.0
      %1554 = vmatpush1.msra.mxu0 0.0
      %1555 = vmatprep.subr.mxu0 0.0
      %1556 = vmatpush1.msra.mxu0 0.0
      %1557 = vmatprep.subr.mxu0 0.0
      %1558 = vmatpush1.msra.mxu0 0.0
      %1559 = vmatprep.subr.mxu0 0.0
      %1560 = vmatpush1.msra.mxu0 0.0
      %1561 = vmatprep.subr.mxu0 0.0
      %1562 = vmatpush1.msra.mxu0 0.0
      %1563 = vmatprep.subr.mxu0 0.0
      %1564 = vmatpush1.msra.mxu0 0.0
      %1565 = vmatprep.subr.mxu0 0.0
      %1566 = vmatpush1.msra.mxu0 0.0
      %1567 = vmatprep.subr.mxu0 0.0
      %1568 = vmatpush1.msra.mxu0 0.0
      %1569 = vmatprep.subr.mxu0 0.0
      %1570 = vmatpush1.msra.mxu0 0.0
      %1571 = vmatprep.subr.mxu0 0.0
      %1572 = vmatpush1.msra.mxu0 0.0
      %1573 = vmatprep.subr.mxu0 0.0
      %1574 = vmatpush1.msra.mxu0 0.0
      %1575 = vmatprep.subr.mxu0 0.0
      %1576 = vmatpush1.msra.mxu0 0.0
      %1577 = vmatprep.subr.mxu0 0.0
      %1578 = vmatpush1.msra.mxu0 0.0
      %1579 = vmatprep.subr.mxu0 0.0
      %1580 = vmatpush1.msra.mxu0 0.0
      %1581 = vmatprep.subr.mxu0 0.0
      %1582 = vmatpush1.msra.mxu0 0.0
      %1583 = vmatprep.subr.mxu0 0.0
      %1584 = vmatpush1.msra.mxu0 0.0
      %1585 = vmatprep.subr.mxu0 0.0
      %1586 = vmatpush1.msra.mxu0 0.0
      %1587 = vmatprep.subr.mxu0 0.0
      %1588 = vmatpush1.msra.mxu0 0.0
      %1589 = vmatprep.subr.mxu0 0.0
      %1590 = vmatpush1.msra.mxu0 0.0
      %1591 = vmatprep.subr.mxu0 0.0
      %1592 = vmatpush1.msra.mxu0 0.0
      %1593 = vmatprep.subr.mxu0 0.0
      %1594 = vmatpush1.msra.mxu0 0.0
      %1595 = vmatprep.subr.mxu0 0.0
      %1596 = vmatpush1.msra.mxu0 0.0
      %1597 = vmatprep.subr.mxu0 0.0
      %1598 = vmatpush1.msra.mxu0 0.0
      %1599 = vmatprep.subr.mxu0 0.0
      %1600 = vmatpush1.msra.mxu0 0.0
      %1601 = vmatprep.subr.mxu0 0.0
      %1602 = vmatpush1.msra.mxu0 0.0
      %1603 = vmatprep.subr.mxu0 0.0
      %1604 = vmatpush1.msra.mxu0 0.0
      %1605 = vmatprep.subr.mxu0 0.0
      %1606 = vmatpush1.msra.mxu0 0.0
      %1607 = vmatprep.subr.mxu0 0.0
      %1608 = vmatpush1.msra.mxu0 0.0
      %1609 = vmatprep.subr.mxu0 0.0
      %1610 = vmatpush1.msra.mxu0 0.0
      %1611 = vmatprep.mubr.f32.mxu0 0.0
      %1612 = vmatmul.mubr.f32.gmra.mrb[0].mxu0 %v1536
      %v1613 = vpop.f32.mrb[0].mxu0
      %v1614 = vadd.f32 0.0, %v1613
      %v1615 = vpop.f32.mrb[0].mxu0
      %v1616 = vadd.f32 0.0, %v1615
      %1617 = vdwg.mxu0
      %1618 = vmatprep.subr.mxu0 0.0
      %1619 = vmatpush1.msra.mxu0 %v1545
      %1620 = vmatprep.subr.mxu0 0.0
      %1621 = vmatpush1.msra.mxu0 0.0
      %1622 = vmatprep.subr.mxu0 0.0
      %1623 = vmatpush1.msra.mxu0 0.0
      %1624 = vmatprep.subr.mxu0 0.0
      %1625 = vmatpush1.msra.mxu0 0.0
      %1626 = vmatprep.subr.mxu0 0.0
      %1627 = vmatpush1.msra.mxu0 0.0
      %1628 = vmatprep.subr.mxu0 0.0
      %1629 = vmatpush1.msra.mxu0 0.0
      %1630 = vmatprep.subr.mxu0 0.0
      %1631 = vmatpush1.msra.mxu0 0.0
      %1632 = vmatprep.subr.mxu0 0.0
      %1633 = vmatpush1.msra.mxu0 0.0
      %1634 = vmatprep.subr.mxu0 0.0
      %1635 = vmatpush1.msra.mxu0 0.0
      %1636 = vmatprep.subr.mxu0 0.0
      %1637 = vmatpush1.msra.mxu0 0.0
      %1638 = vmatprep.subr.mxu0 0.0
      %1639 = vmatpush1.msra.mxu0 0.0
      %1640 = vmatprep.subr.mxu0 0.0
      %1641 = vmatpush1.msra.mxu0 0.0
      %1642 = vmatprep.subr.mxu0 0.0
      %1643 = vmatpush1.msra.mxu0 0.0
      %1644 = vmatprep.subr.mxu0 0.0
      %1645 = vmatpush1.msra.mxu0 0.0
      %1646 = vmatprep.subr.mxu0 0.0
      %1647 = vmatpush1.msra.mxu0 0.0
      %1648 = vmatprep.subr.mxu0 0.0
      %1649 = vmatpush1.msra.mxu0 0.0
      %1650 = vmatprep.subr.mxu0 0.0
      %1651 = vmatpush1.msra.mxu0 0.0
      %1652 = vmatprep.subr.mxu0 0.0
      %1653 = vmatpush1.msra.mxu0 0.0
      %1654 = vmatprep.subr.mxu0 0.0
      %1655 = vmatpush1.msra.mxu0 0.0
      %1656 = vmatprep.subr.mxu0 0.0
      %1657 = vmatpush1.msra.mxu0 0.0
      %1658 = vmatprep.subr.mxu0 0.0
      %1659 = vmatpush1.msra.mxu0 0.0
      %1660 = vmatprep.subr.mxu0 0.0
      %1661 = vmatpush1.msra.mxu0 0.0
      %1662 = vmatprep.subr.mxu0 0.0
      %1663 = vmatpush1.msra.mxu0 0.0
      %1664 = vmatprep.subr.mxu0 0.0
      %1665 = vmatpush1.msra.mxu0 0.0
      %1666 = vmatprep.subr.mxu0 0.0
      %1667 = vmatpush1.msra.mxu0 0.0
      %1668 = vmatprep.subr.mxu0 0.0
      %1669 = vmatpush1.msra.mxu0 0.0
      %1670 = vmatprep.subr.mxu0 0.0
      %1671 = vmatpush1.msra.mxu0 0.0
      %1672 = vmatprep.subr.mxu0 0.0
      %1673 = vmatpush1.msra.mxu0 0.0
      %1674 = vmatprep.subr.mxu0 0.0
      %1675 = vmatpush1.msra.mxu0 0.0
      %1676 = vmatprep.subr.mxu0 0.0
      %1677 = vmatpush1.msra.mxu0 0.0
      %1678 = vmatprep.subr.mxu0 0.0
      %1679 = vmatpush1.msra.mxu0 0.0
      %1680 = vmatprep.subr.mxu0 0.0
      %1681 = vmatpush1.msra.mxu0 0.0
      %1682 = vmatprep.mubr.f32.mxu0 0.0
      %1683 = vmatmul.mubr.f32.gmra.mrb[0].mxu0 %v1536
      %v1684 = vpop.f32.mrb[0].mxu0
      %v1685 = vadd.f32 0.0, %v1684
      %v1686 = vpop.f32.mrb[0].mxu0
      %1687 = vdwg.mxu0
      %v1688 = vadd.f32 %v1518, %v1614
      %v1689 = vadd.f32 %v1519, %v1616
      %v1690 = vadd.f32 %v1520, %v1685
      %v1691 = vld [vmem:[%s2] sm:$0xff]
      %1693 = vset.pattern.permute.xlu0 0
      %1694 = vperm.xlu0 %1693, %v1691
      %v1695 = vpop.permute.xlu0 %1694
      %v1697 = vadd.f32 %v1688, %v1695
      %v1698 = vadd.f32 %v1689, %v1695
      %v1699 = vadd.f32 %v1690, %v1695
      %v1700 = vmax.f32 %v1697, 0.0
      %v1701 = vmax.f32 %v1698, 0.0
      %v1702 = vmax.f32 %v1699, 0.0
      %1703 = vst [vmem:[%s170] sm:$0xff] %v1700
      %1704 = vst [vmem:[%s170 + $0x8] sm:$0xff] %v1701
      %1705 = vst [vmem:[%s170 + $0x10] sm:$0xff] %v1702
      %p1706 = scmp.lt.s32.totalorder %s14, 1
      %s1707 = scalar_select %p1706, %s14, 1
      %s1708 = smul.addr %s1707, 3
      %s1709 = smul.addr %s1708, 8
      %s1710 = scalar_lea.vmem %s3, %s1709
      // Predicated region
      $region33: #{basic_conv2d.1} parent=31 // pred_check
        %p1711 = pneg %p100
      $region34: #{basic_conv2d.1} parent=31 // pred_check_branch
        %1713 = sbr.rel (%p1711) target = $region36
      $region35: #{basic_conv2d.1} parent=31 // pred_region
        _
      $region36: #{basic_conv2d.1} parent=31 // pred_fallthru
        _
    $region32: #{basic_conv2d.1} parent=5 // pred_fallthru
      _
    %p1714 = scmp.le.s32.totalorder 2, %s9
    // Predicated region
    $region37: #{basic_conv2d.1} parent=5 // pred_check
      %p1715 = pneg %p1714
    $region38: #{basic_conv2d.1} parent=5 // pred_check_branch
      %1717 = sbr.rel (%p1715) target = $region40
    $region39: #{basic_conv2d.1} parent=5 // pred_region
      %s1718 = ssub.s32 %s9, 2
      // Predicated region
      $region41: #{basic_conv2d.1} parent=39 // pred_check
        %p1719 = pneg %p106
      $region42: #{basic_conv2d.1} parent=39 // pred_check_branch
        %1721 = sbr.rel (%p1719) target = $region44
      $region43: #{basic_conv2d.1} parent=39 // pred_region
        %p1722 = scmp.lt.s32.totalorder %s15, 1
        %s1723 = scalar_select %p1722, %s15, 1
        %s1724 = smul.addr %s1723, 3
        %s1725 = smul.addr %s1724, 8
        %s1726 = scalar_lea.vmem %s3, %s1725
      $region44: #{basic_conv2d.1} parent=39 // pred_fallthru
        _
    $region40: #{basic_conv2d.1} parent=5 // pred_fallthru
      _
  $region6: #{basic_conv2d.1} parent=0 // loop_footer
    %s13 = sadd.s32 1, %s9
  $region7: #{basic_conv2d.1} parent=0 // loop_footer_branch
    %8 = sbr.rel target = $region3
  $region8: #{basic_conv2d.1} parent=0 // loop_exit
    _

</llo_original>
